<compile_context>
chip_gen: v6e
topology: v6e:2x2x1
jax: 0.10.0
libtpu: 0.0.40
codegen_flags: <defaults>
</compile_context>

<pallas_src>
import jax
import jax.numpy as jnp
from jax.experimental import pallas as pl
from jax.experimental.pallas import tpu as pltpu

_VMEM_LIMIT = 64 * 1024 * 1024   # explicit scoped-VMEM budget (tiles below are far smaller)


def _round_up(x, m):
    return ((x + m - 1) // m) * m


# ---------------------------------------------------------------------------
# Pallas kernel 1: per-sample CondConv matmul, lane-dense (B, O, M) output
# ---------------------------------------------------------------------------

def _condconv_matmul_kernel(w_ref, p_ref, b_ref, out_ref):
    # w_ref: (O, Kp) bf16, p_ref: (Kp, TM) bf16, b_ref: (O, 1) f32 -> out (O, TM) f32.
    acc = jnp.dot(w_ref[...], p_ref[...], preferred_element_type=jnp.float32)
    out_ref[...] = acc + b_ref[...]


def condconv_matmul(w_t, patches_t, bias):
    """w_t: (B, O, K) f32; patches_t: (B, K, M) f32; bias: (O,) f32 or None -> (B, O, M) f32."""
    B, O, K = w_t.shape
    M = patches_t.shape[2]
    Kp = _round_up(K, 128)
    TM = min(512, _round_up(M, 128))
    Mp = _round_up(M, TM)

    # Zero-pad contraction dim to a 128 multiple and M to the tile size; cast MXU operands
    # to bf16 (f32 accumulation inside the kernel).
    w_p = jnp.pad(w_t, ((0, 0), (0, 0), (0, Kp - K))).astype(jnp.bfloat16)
    p_p = jnp.pad(patches_t, ((0, 0), (0, Kp - K), (0, Mp - M))).astype(jnp.bfloat16)
    if bias is None:
        b_p = jnp.zeros((1, O, 1), jnp.float32)
    else:
        b_p = bias.reshape(1, O, 1).astype(jnp.float32)

    flops = 2 * B * O * Kp * Mp
    bytes_accessed = w_p.size * 2 + p_p.size * 2 + b_p.size * 4 + B * O * Mp * 4

    out = pl.pallas_call(
        _condconv_matmul_kernel,
        out_shape=jax.ShapeDtypeStruct((B, O, Mp), jnp.float32),
        grid=(B, Mp // TM),
        in_specs=[
            pl.BlockSpec((None, O, Kp), lambda b, m: (b, 0, 0)),
            pl.BlockSpec((None, Kp, TM), lambda b, m: (b, 0, m)),
            pl.BlockSpec((None, O, 1), lambda b, m: (0, 0, 0)),
        ],
        out_specs=pl.BlockSpec((None, O, TM), lambda b, m: (b, 0, m)),
        compiler_params=pltpu.CompilerParams(
            dimension_semantics=("parallel", "parallel"),
            vmem_limit_bytes=_VMEM_LIMIT),
        cost_estimate=pl.CostEstimate(flops=int(flops), transcendentals=0,
                                      bytes_accessed=int(bytes_accessed)),
    )(w_p, p_p, b_p)
    return out[:, :, :M]


# ---------------------------------------------------------------------------
# Pallas kernel 2: deformable 4-corner gather + interp as tiled one-hot matmul
# ---------------------------------------------------------------------------

def _deform_sample_kernel(idx_ref, g_ref, xt_ref, out_ref, acc_ref):
    # idx_ref/g_ref: (4, TMN); xt_ref: (C, TS) bf16; out/acc: (C, TMN) f32.
    s = pl.program_id(2)
    TS = xt_ref.shape[1]
    TMN = idx_ref.shape[1]

    @pl.when(s == 0)
    def _():
        acc_ref[...] = jnp.zeros_like(acc_ref)

    # One-hot interpolation matrix for this S-tile, built in f32 on the VPU
    # (v5e-friendly), cast to bf16 only right before the MXU dot.
    s_base = s * TS
    iota = jax.lax.broadcasted_iota(jnp.int32, (TS, TMN), 0) + s_base
    a = jnp.zeros((TS, TMN), jnp.float32)
    for corner in range(4):                         # lt, rb, lb, rt
        idx_c = idx_ref[corner:corner + 1, :]       # (1, TMN) int32
        g_c = g_ref[corner:corner + 1, :]           # (1, TMN) f32
        a = a + jnp.where(iota == idx_c, g_c, 0.0)

    acc_ref[...] += jnp.dot(xt_ref[...], a.astype(jnp.bfloat16),
                            preferred_element_type=jnp.float32)

    @pl.when(s == pl.num_programs(2) - 1)
    def _():
        out_ref[...] = acc_ref[...]


def deform_sample(idx, g, xsrc_t):
    """idx, g: (B, 4, MN); xsrc_t: (B, C, S) -> (B, C, MN) f32 (lane-dense over MN)."""
    B, _, MN = idx.shape
    C, S = xsrc_t.shape[1], xsrc_t.shape[2]

    TMN = min(512, _round_up(MN, 128))
    MNp = _round_up(MN, TMN)
    TS = min(512, _round_up(S, 128))
    Sp = _round_up(S, TS)

    # Pad MN with idx=-1 / g=0 (matches nothing, contributes zero) and S with zero rows.
    idx_p = jnp.pad(idx.astype(jnp.int32), ((0, 0), (0, 0), (0, MNp - MN)),
                    constant_values=-1)
    g_p = jnp.pad(g.astype(jnp.float32), ((0, 0), (0, 0), (0, MNp - MN)))
    x_p = jnp.pad(xsrc_t, ((0, 0), (0, 0), (0, Sp - S))).astype(jnp.bfloat16)

    flops = 2 * B * C * Sp * MNp
    bytes_accessed = idx_p.size * 4 + g_p.size * 4 + x_p.size * 2 + B * C * MNp * 4

    out = pl.pallas_call(
        _deform_sample_kernel,
        out_shape=jax.ShapeDtypeStruct((B, C, MNp), jnp.float32),
        grid=(B, MNp // TMN, Sp // TS),
        in_specs=[
            pl.BlockSpec((None, 4, TMN), lambda b, m, s: (b, 0, m)),
            pl.BlockSpec((None, 4, TMN), lambda b, m, s: (b, 0, m)),
            pl.BlockSpec((None, C, TS), lambda b, m, s: (b, 0, s)),
        ],
        out_specs=pl.BlockSpec((None, C, TMN), lambda b, m, s: (b, 0, m)),
        scratch_shapes=[pltpu.VMEM((C, TMN), jnp.float32)],
        compiler_params=pltpu.CompilerParams(
            dimension_semantics=("parallel", "parallel", "arbitrary"),
            vmem_limit_bytes=_VMEM_LIMIT),
        cost_estimate=pl.CostEstimate(flops=int(flops), transcendentals=0,
                                      bytes_accessed=int(bytes_accessed)),
    )(idx_p, g_p, x_p)
    return out[:, :, :MN]


# ---------------------------------------------------------------------------
# Plain-JAX glue (layout, im2col, routing, parameter mixing)
# ---------------------------------------------------------------------------

def im2col_3d_t(x, ks, stride, padding):
    """x: (B, C, H, W, D) -> patches_T (B, C*ks^3, Ho*Wo*Do).
    K order is (c, kx, ky, kz) to match weight.reshape(E, O, -1); no transpose needed."""
    B, C, H, W, D = x.shape
    xp = jnp.pad(x, ((0, 0), (0, 0), (padding,) * 2, (padding,) * 2, (padding,) * 2)) \
        if padding else x
    Ho = (H + 2 * padding - ks) // stride + 1
    Wo = (W + 2 * padding - ks) // stride + 1
    Do = (D + 2 * padding - ks) // stride + 1
    cols = []
    for kx in range(ks):
        for ky in range(ks):
            for kz in range(ks):
                cols.append(xp[:, :,
                               kx:kx + Ho * stride:stride,
                               ky:ky + Wo * stride:stride,
                               kz:kz + Do * stride:stride])
    P = jnp.stack(cols, axis=2)                              # (B, C, ks^3, Ho, Wo, Do)
    return P.reshape(B, C * ks ** 3, Ho * Wo * Do), (Ho, Wo, Do)


def sconv3d_forward(x, expert_w, bias, fc_w, fc_b, ks, stride, padding):
    """SConv3D (CondConv 3D). x: (B, C, H, W, D); expert_w: (E, O, C, ks, ks, ks)."""
    B = x.shape[0]
    E, O = expert_w.shape[0], expert_w.shape[1]
    pooled = jnp.mean(x, axis=(2, 3, 4))                     # adaptive_avg_pool3d(1,1,1)
    routing = jax.nn.sigmoid(pooled @ fc_w.T + fc_b)         # (B, E); dropout = identity (eval)
    w_flat = expert_w.reshape(E, O, -1)                      # (E, O, K)
    w_mix_t = jnp.einsum('be,eok->bok', routing, w_flat)     # per-sample mixed kernel (B, O, K)
    patches_t, (Ho, Wo, Do) = im2col_3d_t(x, ks, stride, padding)   # (B, K, M)
    out = condconv_matmul(w_mix_t, patches_t, bias)          # Pallas matmul, (B, O, M)
    return out.reshape(B, O, Ho, Wo, Do)                     # lane-dense output: no transpose


def reshape_x_offset(x_offset, ks):
    b, c, h, w, d, N = x_offset.shape
    chunks = [x_offset[..., s:s + ks].reshape(b, c, h, w, d * ks) for s in range(0, N, ks)]
    xo = jnp.concatenate(chunks, axis=-1)
    return xo.reshape(b, c, h * ks, w * ks, d * ks)


def ddconv3d_forward(x, params, ks=3, padding=1, stride=1, p_weight_is_zero=False):
    B, C, H, W, D = x.shape
    N = ks ** 3

    # offset = p_conv(x): kernel 3, pad 1, stride `stride`
    if p_weight_is_zero:
        # Faithful-to-init shortcut: zero expert weights => output is the broadcast bias.
        h = (H + 2 - 3) // stride + 1
        w = (W + 2 - 3) // stride + 1
        d = (D + 2 - 3) // stride + 1
        offset = jnp.broadcast_to(
            params['p_bias'].astype(jnp.float32).reshape(1, 3 * N, 1, 1, 1),
            (B, 3 * N, h, w, d))
    else:
        offset = sconv3d_forward(x, params['p_weight'], params['p_bias'],
                                 params['p_fc_w'], params['p_fc_b'],
                                 ks=3, stride=stride, padding=1)       # (B, 3N, h, w, d)

    xpad = jnp.pad(x, ((0, 0), (0, 0), (padding,) * 2, (padding,) * 2, (padding,) * 2)) \
        if padding else x
    Hp, Wp, Dp = xpad.shape[2], xpad.shape[3], xpad.shape[4]
    h, w, d = offset.shape[2], offset.shape[3], offset.shape[4]

    # _get_p: p = p_0 + p_n + offset, then permute -> (B, h, w, d, 3N)
    r = jnp.arange(-(ks - 1) // 2, (ks - 1) // 2 + 1)
    pnx, pny, pnz = jnp.meshgrid(r, r, r, indexing='ij')
    p_n = jnp.concatenate([pnx.ravel(), pny.ravel(), pnz.ravel()]).astype(jnp.float32)
    p_n = p_n.reshape(1, 3 * N, 1, 1, 1)
    p0x, p0y, p0z = jnp.meshgrid(jnp.arange(1, h * stride + 1, stride),
                                 jnp.arange(1, w * stride + 1, stride),
                                 jnp.arange(1, d * stride + 1, stride), indexing='ij')
    p_0 = jnp.concatenate([
        jnp.broadcast_to(p0x[None, None], (1, N, h, w, d)),
        jnp.broadcast_to(p0y[None, None], (1, N, h, w, d)),
        jnp.broadcast_to(p0z[None, None], (1, N, h, w, d)),
    ], axis=1).astype(jnp.float32)
    p = (p_0 + p_n + offset).transpose(0, 2, 3, 4, 1)                  # (B, h, w, d, 3N)

    q_lt = jnp.floor(p)
    q_rb = q_lt + 1.0
    # Faithful to the module: dims N: (y AND z) clamped to x.size(3)-1.
    q_lt = jnp.concatenate([jnp.clip(q_lt[..., :N], 0, Hp - 1),
                            jnp.clip(q_lt[..., N:], 0, Wp - 1)], -1).astype(jnp.int32)
    q_rb = jnp.concatenate([jnp.clip(q_rb[..., :N], 0, Hp - 1),
                            jnp.clip(q_rb[..., N:], 0, Wp - 1)], -1).astype(jnp.int32)
    q_lb = jnp.concatenate([q_lt[..., :N], q_rb[..., N:]], -1)
    q_rt = jnp.concatenate([q_rb[..., :N], q_lt[..., N:]], -1)
    p = jnp.concatenate([jnp.clip(p[..., :N], 0, Hp - 1),
                         jnp.clip(p[..., N:2 * N], 0, Wp - 1),
                         jnp.clip(p[..., 2 * N:], 0, Dp - 1)], -1)

    def g_weight(q):   # faithful (1 + (q - p)) weights of the source module
        qf = q.astype(p.dtype)
        return ((1 + (qf[..., :N] - p[..., :N]))
                * (1 + (qf[..., N:2 * N] - p[..., N:2 * N]))
                * (1 + (qf[..., 2 * N:] - p[..., 2 * N:])))

    def flat_index(q):  # faithful to _get_x_q: q_x * padded_w + q_y + q_z
        return q[..., :N] * Wp + q[..., N:2 * N] + q[..., 2 * N:]

    corners = [q_lt, q_rb, q_lb, q_rt]
    MN = h * w * d * N
    # Stack corners on axis=1 so the kernel layout (B, 4, MN) needs no transpose.
    g = jnp.stack([g_weight(q) for q in corners], axis=1).reshape(B, 4, MN)
    idx = jnp.stack([flat_index(q) for q in corners], axis=1).reshape(B, 4, MN).astype(jnp.int32)
    xsrc_t = xpad.reshape(B, C, Hp * Wp * Dp)                          # (B, C, S), no transpose

    x_off = deform_sample(idx, g, xsrc_t)                              # Pallas, (B, C, MN)
    x_offset = x_off.reshape(B, C, h, w, d, N)
    x_offset = reshape_x_offset(x_offset, ks)                          # (B, C, h*ks, w*ks, d*ks)

    # final conv: SConv3D(inc, outc, kernel_size=ks, stride=ks, bias=None)
    out = sconv3d_forward(x_offset, params['conv_weight'], None,
                          params['conv_fc_w'], params['conv_fc_b'],
                          ks=ks, stride=ks, padding=0)                 # (B, outc, h, w, d)
    return out


# ---------------------------------------------------------------------------
# Main
# ---------------------------------------------------------------------------

if __name__ == "__main__":
    key = jax.random.PRNGKey(0)
    k = jax.random.split(key, 6)
    B, C, H, W, D = 2, 4, 4, 4, 4
    outc, ks, E = 8, 3, 8
    N = ks ** 3

    x = jax.random.normal(k[0], (B, C, H, W, D), jnp.float32)
    params = {
        # p_conv: SConv3D(inc, 3*ks^3, kernel_size=3, padding=1, stride=1); weight zeroed as in module
        'p_weight': jnp.zeros((E, 3 * N, C, 3, 3, 3), jnp.float32),
        'p_bias': jax.random.uniform(k[1], (3 * N,), jnp.float32, -0.1, 0.1),
        'p_fc_w': 0.1 * jax.random.normal(k[2], (E, C), jnp.float32),
        'p_fc_b': jnp.zeros((E,), jnp.float32),
        # conv: SConv3D(inc, outc, kernel_size=ks, stride=ks, bias=None)
        'conv_weight': 0.1 * jax.random.normal(k[3], (E, outc, C, ks, ks, ks), jnp.float32),
        'conv_fc_w': 0.1 * jax.random.normal(k[4], (E, C), jnp.float32),
        'conv_fc_b': jnp.zeros((E,), jnp.float32),
    }

    # Static short-circuit flag (faithful: nn.init.constant_(p_conv.weight, 0)).
    p_weight_is_zero = bool(jnp.all(params['p_weight'] == 0))

    fwd = jax.jit(ddconv3d_forward,
                  static_argnames=('ks', 'padding', 'stride', 'p_weight_is_zero'))
    out = fwd(x, params, p_weight_is_zero=p_weight_is_zero)
    out = jax.block_until_ready(out)
    assert out.shape == (B, outc, H, W, D), out.shape
    assert bool(jnp.all(jnp.isfinite(out)))
    print("KERNEL_OK")
</pallas_src>

<mosaic_0001>
module attributes {stable_mosaic.version = 11 : i64} {
  func.func @_deform_sample_kernel(%arg0: i32, %arg1: i32, %arg2: i32, %arg3: memref<1x4x512xi32, #tpu.memory_space<vmem>>, %arg4: memref<1x4x512xf32, #tpu.memory_space<vmem>>, %arg5: memref<1x4x256xbf16, #tpu.memory_space<vmem>>, %arg6: memref<1x4x512xf32, #tpu.memory_space<vmem>>, %arg7: memref<4x512xf32, #tpu.memory_space<vmem>>) attributes {dimension_semantics = [#tpu.dimension_semantics<parallel>, #tpu.dimension_semantics<parallel>, #tpu.dimension_semantics<arbitrary>], iteration_bounds = array<i64: 2, 4, 1>, scalar_prefetch = 0 : i64, scratch_operands = 1 : i64, tpu.core_type = #tpu.core_type<tc>, window_params = [{transform_indices = @transform_0, window_bounds = array<i64: 1, 4, 512>}, {transform_indices = @transform_1, window_bounds = array<i64: 1, 4, 512>}, {transform_indices = @transform_2, window_bounds = array<i64: 1, 4, 256>}, {transform_indices = @transform_3, window_bounds = array<i64: 1, 4, 512>}]} {
    %c0_i32 = arith.constant 0 : i32
    %0 = arith.cmpi eq, %arg2, %c0_i32 : i32
    %1 = arith.extui %0 : i1 to i32
    %c0_i32_0 = arith.constant 0 : i32
    %2 = arith.cmpi ne, %1, %c0_i32_0 : i32
    scf.if %2 {
      %cst_35 = arith.constant 0.000000e+00 : f32
      %62 = vector.broadcast %cst_35 : f32 to vector<4x512xf32>
      %c0_36 = arith.constant 0 : index
      %c0_37 = arith.constant 0 : index
      %63 = vector.load %arg7[%c0_36, %c0_37] : memref<4x512xf32, #tpu.memory_space<vmem>>, vector<4x512xf32>
      tpu.vector_store %arg7[%c0_36, %c0_37], %62 {strides = array<i32>} : memref<4x512xf32, #tpu.memory_space<vmem>>, vector<4x512xf32>,
    } else {
    }
    %c256_i32 = arith.constant 256 : i32
    %3 = arith.muli %arg2, %c256_i32 : i32
    %4 = tpu.iota {dimensions = array<i32: 0>} : vector<256x512xi32>
    %5 = vector.broadcast %3 : i32 to vector<256x512xi32>
    %6 = arith.addi %4, %5 : vector<256x512xi32>
    %cst = arith.constant 0.000000e+00 : f32
    %7 = vector.broadcast %cst : f32 to vector<256x512xf32>
    %c0 = arith.constant 0 : index
    %c0_1 = arith.constant 0 : index
    %c0_2 = arith.constant 0 : index
    %8 = vector.load %arg3[%c0, %c0_1, %c0_2] : memref<1x4x512xi32, #tpu.memory_space<vmem>>, vector<1x1x512xi32>
    %9 = vector.shape_cast %8 : vector<1x1x512xi32> to vector<1x512xi32>
    %c0_3 = arith.constant 0 : index
    %c0_4 = arith.constant 0 : index
    %c0_5 = arith.constant 0 : index
    %10 = vector.load %arg4[%c0_3, %c0_4, %c0_5] : memref<1x4x512xf32, #tpu.memory_space<vmem>>, vector<1x1x512xf32>
    %11 = vector.shape_cast %10 : vector<1x1x512xf32> to vector<1x512xf32>
    %12 = vector.broadcast %9 : vector<1x512xi32> to vector<256x512xi32>
    %13 = arith.cmpi eq, %6, %12 : vector<256x512xi32>
    %cst_6 = arith.constant 0.000000e+00 : f32
    %14 = vector.shape_cast %11 : vector<1x512xf32> to vector<1x512xf32>
    %15 = vector.broadcast %14 : vector<1x512xf32> to vector<256x512xf32>
    %16 = vector.broadcast %cst_6 : f32 to vector<256x512xf32>
    %17 = arith.select %13, %15, %16 : vector<256x512xi1>, vector<256x512xf32>
    %18 = arith.addf %7, %17 : vector<256x512xf32>
    %c0_7 = arith.constant 0 : index
    %c1 = arith.constant 1 : index
    %c0_8 = arith.constant 0 : index
    %19 = vector.load %arg3[%c0_7, %c1, %c0_8] : memref<1x4x512xi32, #tpu.memory_space<vmem>>, vector<1x1x512xi32>
    %20 = vector.shape_cast %19 : vector<1x1x512xi32> to vector<1x512xi32>
    %c0_9 = arith.constant 0 : index
    %c1_10 = arith.constant 1 : index
    %c0_11 = arith.constant 0 : index
    %21 = vector.load %arg4[%c0_9, %c1_10, %c0_11] : memref<1x4x512xf32, #tpu.memory_space<vmem>>, vector<1x1x512xf32>
    %22 = vector.shape_cast %21 : vector<1x1x512xf32> to vector<1x512xf32>
    %23 = vector.broadcast %20 : vector<1x512xi32> to vector<256x512xi32>
    %24 = arith.cmpi eq, %6, %23 : vector<256x512xi32>
    %cst_12 = arith.constant 0.000000e+00 : f32
    %25 = vector.shape_cast %22 : vector<1x512xf32> to vector<1x512xf32>
    %26 = vector.broadcast %25 : vector<1x512xf32> to vector<256x512xf32>
    %27 = vector.broadcast %cst_12 : f32 to vector<256x512xf32>
    %28 = arith.select %24, %26, %27 : vector<256x512xi1>, vector<256x512xf32>
    %29 = arith.addf %18, %28 : vector<256x512xf32>
    %c0_13 = arith.constant 0 : index
    %c2 = arith.constant 2 : index
    %c0_14 = arith.constant 0 : index
    %30 = vector.load %arg3[%c0_13, %c2, %c0_14] : memref<1x4x512xi32, #tpu.memory_space<vmem>>, vector<1x1x512xi32>
    %31 = vector.shape_cast %30 : vector<1x1x512xi32> to vector<1x512xi32>
    %c0_15 = arith.constant 0 : index
    %c2_16 = arith.constant 2 : index
    %c0_17 = arith.constant 0 : index
    %32 = vector.load %arg4[%c0_15, %c2_16, %c0_17] : memref<1x4x512xf32, #tpu.memory_space<vmem>>, vector<1x1x512xf32>
    %33 = vector.shape_cast %32 : vector<1x1x512xf32> to vector<1x512xf32>
    %34 = vector.broadcast %31 : vector<1x512xi32> to vector<256x512xi32>
    %35 = arith.cmpi eq, %6, %34 : vector<256x512xi32>
    %cst_18 = arith.constant 0.000000e+00 : f32
    %36 = vector.shape_cast %33 : vector<1x512xf32> to vector<1x512xf32>
    %37 = vector.broadcast %36 : vector<1x512xf32> to vector<256x512xf32>
    %38 = vector.broadcast %cst_18 : f32 to vector<256x512xf32>
    %39 = arith.select %35, %37, %38 : vector<256x512xi1>, vector<256x512xf32>
    %40 = arith.addf %29, %39 : vector<256x512xf32>
    %c0_19 = arith.constant 0 : index
    %c3 = arith.constant 3 : index
    %c0_20 = arith.constant 0 : index
    %41 = vector.load %arg3[%c0_19, %c3, %c0_20] : memref<1x4x512xi32, #tpu.memory_space<vmem>>, vector<1x1x512xi32>
    %42 = vector.shape_cast %41 : vector<1x1x512xi32> to vector<1x512xi32>
    %c0_21 = arith.constant 0 : index
    %c3_22 = arith.constant 3 : index
    %c0_23 = arith.constant 0 : index
    %43 = vector.load %arg4[%c0_21, %c3_22, %c0_23] : memref<1x4x512xf32, #tpu.memory_space<vmem>>, vector<1x1x512xf32>
    %44 = vector.shape_cast %43 : vector<1x1x512xf32> to vector<1x512xf32>
    %45 = vector.broadcast %42 : vector<1x512xi32> to vector<256x512xi32>
    %46 = arith.cmpi eq, %6, %45 : vector<256x512xi32>
    %cst_24 = arith.constant 0.000000e+00 : f32
    %47 = vector.shape_cast %44 : vector<1x512xf32> to vector<1x512xf32>
    %48 = vector.broadcast %47 : vector<1x512xf32> to vector<256x512xf32>
    %49 = vector.broadcast %cst_24 : f32 to vector<256x512xf32>
    %50 = arith.select %46, %48, %49 : vector<256x512xi1>, vector<256x512xf32>
    %51 = arith.addf %40, %50 : vector<256x512xf32>
    %c0_25 = arith.constant 0 : index
    %c0_26 = arith.constant 0 : index
    %52 = vector.load %arg7[%c0_25, %c0_26] : memref<4x512xf32, #tpu.memory_space<vmem>>, vector<4x512xf32>
    %c0_27 = arith.constant 0 : index
    %c0_28 = arith.constant 0 : index
    %c0_29 = arith.constant 0 : index
    %53 = vector.load %arg5[%c0_27, %c0_28, %c0_29] : memref<1x4x256xbf16, #tpu.memory_space<vmem>>, vector<1x4x256xbf16>
    %54 = vector.shape_cast %53 : vector<1x4x256xbf16> to vector<4x256xbf16>
    %55 = arith.truncf %51 : vector<256x512xf32> to vector<256x512xbf16>
    %cst_30 = arith.constant dense<0.000000e+00> : vector<4x512xf32>
    %56 = tpu.matmul %54, %55, %cst_30 {dimension_numbers = #tpu.dot_dimension_numbers<[1], [0], [0], [1], [0, 0, 1, 1], [], []>} : vector<4x256xbf16>, vector<256x512xbf16>, vector<4x512xf32> -> vector<4x512xf32>
    %57 = arith.addf %52, %56 : vector<4x512xf32>
    %c0_31 = arith.constant 0 : index
    %c0_32 = arith.constant 0 : index
    %58 = vector.load %arg7[%c0_31, %c0_32] : memref<4x512xf32, #tpu.memory_space<vmem>>, vector<4x512xf32>
    tpu.vector_store %arg7[%c0_31, %c0_32], %57 {strides = array<i32>} : memref<4x512xf32, #tpu.memory_space<vmem>>, vector<4x512xf32>,
    %c0_i32_33 = arith.constant 0 : i32
    %59 = arith.cmpi eq, %arg2, %c0_i32_33 : i32
    %60 = arith.extui %59 : i1 to i32
    %c0_i32_34 = arith.constant 0 : i32
    %61 = arith.cmpi ne, %60, %c0_i32_34 : i32
    scf.if %61 {
      %c0_35 = arith.constant 0 : index
      %c0_36 = arith.constant 0 : index
      %62 = vector.load %arg7[%c0_35, %c0_36] : memref<4x512xf32, #tpu.memory_space<vmem>>, vector<4x512xf32>
      %c0_37 = arith.constant 0 : index
      %c0_38 = arith.constant 0 : index
      %c0_39 = arith.constant 0 : index
      %63 = vector.load %arg6[%c0_37, %c0_38, %c0_39] : memref<1x4x512xf32, #tpu.memory_space<vmem>>, vector<1x4x512xf32>
      %64 = vector.shape_cast %63 : vector<1x4x512xf32> to vector<4x512xf32>
      %65 = vector.shape_cast %62 : vector<4x512xf32> to vector<1x4x512xf32>
      tpu.vector_store %arg6[%c0_37, %c0_38, %c0_39], %65 {strides = array<i32>} : memref<1x4x512xf32, #tpu.memory_space<vmem>>, vector<1x4x512xf32>,
    } else {
    }
    return
  }
  func.func @transform_0(%arg0: i32, %arg1: i32, %arg2: i32) -> (i32, i32, i32) {
    %c0_i32 = arith.constant 0 : i32
    %c0_i32_0 = arith.constant 0 : i32
    return %arg0, %c0_i32, %arg1 : i32, i32, i32
  }
  func.func @transform_1(%arg0: i32, %arg1: i32, %arg2: i32) -> (i32, i32, i32) {
    %c0_i32 = arith.constant 0 : i32
    %c0_i32_0 = arith.constant 0 : i32
    return %arg0, %c0_i32, %arg1 : i32, i32, i32
  }
  func.func @transform_2(%arg0: i32, %arg1: i32, %arg2: i32) -> (i32, i32, i32) {
    %c0_i32 = arith.constant 0 : i32
    %c0_i32_0 = arith.constant 0 : i32
    return %arg0, %c0_i32, %arg2 : i32, i32, i32
  }
  func.func @transform_3(%arg0: i32, %arg1: i32, %arg2: i32) -> (i32, i32, i32) {
    %c0_i32 = arith.constant 0 : i32
    %c0_i32_0 = arith.constant 0 : i32
    return %arg0, %c0_i32, %arg1 : i32, i32, i32
  }
}

module attributes {stable_mosaic.version = 11 : i64} {
  func.func @_condconv_matmul_kernel(%arg0: i32, %arg1: i32, %arg2: memref<1x8x128xbf16, #tpu.memory_space<vmem>>, %arg3: memref<1x128x128xbf16, #tpu.memory_space<vmem>>, %arg4: memref<1x8x1xf32, #tpu.memory_space<vmem>>, %arg5: memref<1x8x128xf32, #tpu.memory_space<vmem>>) attributes {dimension_semantics = [#tpu.dimension_semantics<parallel>, #tpu.dimension_semantics<parallel>], iteration_bounds = array<i64: 2, 1>, scalar_prefetch = 0 : i64, scratch_operands = 0 : i64, tpu.core_type = #tpu.core_type<tc>, window_params = [{transform_indices = @transform_0, window_bounds = array<i64: 1, 8, 128>}, {transform_indices = @transform_1, window_bounds = array<i64: 1, 128, 128>}, {pipeline_mode = #tpu.pipeline_mode<synchronous>, transform_indices = @transform_2, window_bounds = array<i64: 1, 8, 1>}, {transform_indices = @transform_3, window_bounds = array<i64: 1, 8, 128>}]} {
    %c0 = arith.constant 0 : index
    %c0_0 = arith.constant 0 : index
    %c0_1 = arith.constant 0 : index
    %0 = vector.load %arg2[%c0, %c0_0, %c0_1] : memref<1x8x128xbf16, #tpu.memory_space<vmem>>, vector<1x8x128xbf16>
    %1 = vector.shape_cast %0 : vector<1x8x128xbf16> to vector<8x128xbf16>
    %c0_2 = arith.constant 0 : index
    %c0_3 = arith.constant 0 : index
    %c0_4 = arith.constant 0 : index
    %2 = vector.load %arg3[%c0_2, %c0_3, %c0_4] : memref<1x128x128xbf16, #tpu.memory_space<vmem>>, vector<1x128x128xbf16>
    %3 = vector.shape_cast %2 : vector<1x128x128xbf16> to vector<128x128xbf16>
    %cst = arith.constant dense<0.000000e+00> : vector<8x128xf32>
    %4 = tpu.matmul %1, %3, %cst {dimension_numbers = #tpu.dot_dimension_numbers<[1], [0], [0], [1], [0, 0, 1, 1], [], []>} : vector<8x128xbf16>, vector<128x128xbf16>, vector<8x128xf32> -> vector<8x128xf32>
    %c0_5 = arith.constant 0 : index
    %c0_6 = arith.constant 0 : index
    %c0_7 = arith.constant 0 : index
    %5 = vector.load %arg4[%c0_5, %c0_6, %c0_7] : memref<1x8x1xf32, #tpu.memory_space<vmem>>, vector<1x8x1xf32>
    %6 = vector.shape_cast %5 : vector<1x8x1xf32> to vector<8x1xf32>
    %7 = vector.broadcast %6 : vector<8x1xf32> to vector<8x128xf32>
    %8 = arith.addf %4, %7 : vector<8x128xf32>
    %c0_8 = arith.constant 0 : index
    %c0_9 = arith.constant 0 : index
    %c0_10 = arith.constant 0 : index
    %9 = vector.load %arg5[%c0_8, %c0_9, %c0_10] : memref<1x8x128xf32, #tpu.memory_space<vmem>>, vector<1x8x128xf32>
    %10 = vector.shape_cast %9 : vector<1x8x128xf32> to vector<8x128xf32>
    %11 = vector.shape_cast %8 : vector<8x128xf32> to vector<1x8x128xf32>
    tpu.vector_store %arg5[%c0_8, %c0_9, %c0_10], %11 {strides = array<i32>} : memref<1x8x128xf32, #tpu.memory_space<vmem>>, vector<1x8x128xf32>,
    return
  }
  func.func @transform_0(%arg0: i32, %arg1: i32) -> (i32, i32, i32) {
    %c0_i32 = arith.constant 0 : i32
    %c0_i32_0 = arith.constant 0 : i32
    %c0_i32_1 = arith.constant 0 : i32
    return %arg0, %c0_i32, %c0_i32_0 : i32, i32, i32
  }
  func.func @transform_1(%arg0: i32, %arg1: i32) -> (i32, i32, i32) {
    %c0_i32 = arith.constant 0 : i32
    %c0_i32_0 = arith.constant 0 : i32
    return %arg0, %c0_i32, %arg1 : i32, i32, i32
  }
  func.func @transform_2(%arg0: i32, %arg1: i32) -> (i32, i32, i32) {
    %c0_i32 = arith.constant 0 : i32
    %c0_i32_0 = arith.constant 0 : i32
    %c0_i32_1 = arith.constant 0 : i32
    %c0_i32_2 = arith.constant 0 : i32
    return %c0_i32, %c0_i32_0, %c0_i32_1 : i32, i32, i32
  }
  func.func @transform_3(%arg0: i32, %arg1: i32) -> (i32, i32, i32) {
    %c0_i32 = arith.constant 0 : i32
    %c0_i32_0 = arith.constant 0 : i32
    return %arg0, %c0_i32, %arg1 : i32, i32, i32
  }
}

</mosaic_0001>

<llo_original>
// kernel: ddconv3d_forward.2
$region0: #{ddconv3d_forward.2}
  #allocation0 [shape = 'u32[]', space=smem, size = 0x4, offset = 0x4, fixed_abs, tag = 'smem constant byte address 0x4 - core index']
  #allocation1 [shape = 'u32[144,128]{1,0:T(1,128)}', space=vmem, size = 0x12000, scoped, tag = 'internal scratch']
  #allocation2 [shape = 'f32[4,512]{1,0:T(4,128)}', space=vmem, size = 0x2000, scoped, tag = 'scratch operand']
  %s0 = inlined_call_operand.vmem [shape: s32[2,4,2048], index: 0, kind: input, shape index: {}]
  %s1 = inlined_call_operand.vmem [shape: f32[2,4,2048], index: 1, kind: input, shape index: {}]
  %s2 = inlined_call_operand.vmem [shape: bf16[2,4,256], index: 2, kind: input, shape index: {}]
  %s3 = inlined_call_operand.vmem [shape: f32[2,4,2048], index: 3, kind: output, shape index: {}]
  %s4 = sld [smem:[#allocation0]]
  $region53: #{ddconv3d_forward.2} parent=0
    _
  %s6 = ssub.s32 1, %s4
  %s7 = scalar_select 0, %s6, %s4
  loop: start=0, step=1, limit=10
  $region2: #{ddconv3d_forward.2} parent=0 // loop_pre_header
    _
  $region3: #{ddconv3d_forward.2} parent=0 // loop_header
    %s9 = sphi 0, %s13
    %p10 = scmp.ge.s32.totalorder %s9, 10
    %s16 = sphi 0, %s35
    %s17 = sphi 0, %s31
    %s18 = sphi 0, %s27
    %s19 = sphi 0, %s16
    %s20 = sphi 0, %s17
    %s21 = sphi 0, %s18
    %s22 = sphi 0, %s19
    %s23 = sphi 0, %s20
    %s24 = sphi 0, %s21
    %s40 = sphi 0, %s42
    %s43 = sphi 0, %s40
    %s44 = sphi 0, %s43
    %s60 = sphi 0, %s44
    %s68 = sphi 0, %s70
    %s71 = sphi 0, %s68
    %s72 = sphi 0, %s71
    %s88 = sphi 0, %s72
    %s96 = sphi 0, %s98
    %s99 = sphi 0, %s96
    %s100 = sphi 0, %s99
    %s116 = sphi 0, %s100
    %s124 = sphi 0, %s126
    %s127 = sphi 0, %s124
    %s128 = sphi 0, %s127
    %s144 = sphi 0, %s128
  $region4: #{ddconv3d_forward.2} parent=0 // loop_header_branch
    %12 = sbr.rel (%p10) target = $region8
  $region5: #{ddconv3d_forward.2} parent=0 // loop_body
    %s14 = ssub.s32 %s9, 1
    %s15 = ssub.s32 %s9, 2
    %s25 = sadd.s32 1, %s18
    %p26 = scmp.ge.s32.totalorder %s25, 1
    %s27 = scalar_select %p26, 0, %s25
    %s28 = sadd.s32 1, %s17
    %s29 = scalar_select %p26, %s28, %s17
    %p30 = scmp.ge.s32.totalorder %s29, 4
    %s31 = scalar_select %p30, 0, %s29
    %s32 = sadd.s32 1, %s16
    %s33 = scalar_select %p30, %s32, %s16
    %p34 = scmp.ge.s32.totalorder %s33, 2
    %s35 = scalar_select %p34, 0, %s33
    %s36 = ssub.s32 %s16, %s35
    %s37 = ssub.s32 %s17, %s31
    %s38 = sor.u32 %s36, %s37
    %p39 = scmp.eq.s32.totalorder %s38, 0
    %s41 = sadd.s32 %s40, 1
    %s42 = scalar_select %p39, %s40, %s41
    %p45 = pneg %p39
    %p46 = scmp.eq.s32.totalorder %s9, 7
    %p47 = por %p45, %p46
    %p48 = scmp.ne.s32.totalorder %s40, %s43
    %p49 = scmp.eq.s32.totalorder %s9, 0
    %p50 = por %p48, %p49
    %p51 = scmp.ne.s32.totalorder %s40, %s43
    %p52 = scmp.eq.s32.totalorder %s14, 7
    %p53 = por %p51, %p52
    %p54 = scmp.ne.s32.totalorder %s43, %s44
    %p55 = scmp.eq.s32.totalorder %s14, 0
    %p56 = por %p54, %p55
    %p57 = scmp.ne.s32.totalorder %s43, %s44
    %p58 = scmp.eq.s32.totalorder %s15, 7
    %p59 = por %p57, %p58
    %p61 = scmp.ne.s32.totalorder %s44, %s60
    %p62 = scmp.eq.s32.totalorder %s15, 0
    %p63 = por %p61, %p62
    %s64 = ssub.s32 %s16, %s35
    %s65 = ssub.s32 %s17, %s31
    %s66 = sor.u32 %s64, %s65
    %p67 = scmp.eq.s32.totalorder %s66, 0
    %s69 = sadd.s32 %s68, 1
    %s70 = scalar_select %p67, %s68, %s69
    %p73 = pneg %p67
    %p74 = scmp.eq.s32.totalorder %s9, 7
    %p75 = por %p73, %p74
    %p76 = scmp.ne.s32.totalorder %s68, %s71
    %p77 = scmp.eq.s32.totalorder %s9, 0
    %p78 = por %p76, %p77
    %p79 = scmp.ne.s32.totalorder %s68, %s71
    %p80 = scmp.eq.s32.totalorder %s14, 7
    %p81 = por %p79, %p80
    %p82 = scmp.ne.s32.totalorder %s71, %s72
    %p83 = scmp.eq.s32.totalorder %s14, 0
    %p84 = por %p82, %p83
    %p85 = scmp.ne.s32.totalorder %s71, %s72
    %p86 = scmp.eq.s32.totalorder %s15, 7
    %p87 = por %p85, %p86
    %p89 = scmp.ne.s32.totalorder %s72, %s88
    %p90 = scmp.eq.s32.totalorder %s15, 0
    %p91 = por %p89, %p90
    %s92 = ssub.s32 %s16, %s35
    %s93 = ssub.s32 %s18, %s27
    %s94 = sor.u32 %s92, %s93
    %p95 = scmp.eq.s32.totalorder %s94, 0
    %s97 = sadd.s32 %s96, 1
    %s98 = scalar_select %p95, %s96, %s97
    %p101 = pneg %p95
    %p102 = scmp.eq.s32.totalorder %s9, 7
    %p103 = por %p101, %p102
    %p104 = scmp.ne.s32.totalorder %s96, %s99
    %p105 = scmp.eq.s32.totalorder %s9, 0
    %p106 = por %p104, %p105
    %p107 = scmp.ne.s32.totalorder %s96, %s99
    %p108 = scmp.eq.s32.totalorder %s14, 7
    %p109 = por %p107, %p108
    %p110 = scmp.ne.s32.totalorder %s99, %s100
    %p111 = scmp.eq.s32.totalorder %s14, 0
    %p112 = por %p110, %p111
    %p113 = scmp.ne.s32.totalorder %s99, %s100
    %p114 = scmp.eq.s32.totalorder %s15, 7
    %p115 = por %p113, %p114
    %p117 = scmp.ne.s32.totalorder %s100, %s116
    %p118 = scmp.eq.s32.totalorder %s15, 0
    %p119 = por %p117, %p118
    %s120 = ssub.s32 %s16, %s35
    %s121 = ssub.s32 %s17, %s31
    %s122 = sor.u32 %s120, %s121
    %p123 = scmp.eq.s32.totalorder %s122, 0
    %s125 = sadd.s32 %s124, 1
    %s126 = scalar_select %p123, %s124, %s125
    %p129 = pneg %p123
    %p130 = scmp.eq.s32.totalorder %s9, 7
    %p131 = por %p129, %p130
    %p132 = scmp.ne.s32.totalorder %s124, %s127
    %p133 = scmp.eq.s32.totalorder %s9, 0
    %p134 = por %p132, %p133
    %p135 = scmp.ne.s32.totalorder %s124, %s127
    %p136 = scmp.eq.s32.totalorder %s14, 7
    %p137 = por %p135, %p136
    %p138 = scmp.ne.s32.totalorder %s127, %s128
    %p139 = scmp.eq.s32.totalorder %s14, 0
    %p140 = por %p138, %p139
    %p141 = scmp.ne.s32.totalorder %s127, %s128
    %p142 = scmp.eq.s32.totalorder %s15, 7
    %p143 = por %p141, %p142
    %p145 = scmp.ne.s32.totalorder %s128, %s144
    %p146 = scmp.eq.s32.totalorder %s15, 0
    %p147 = por %p145, %p146
    %p148 = scmp.le.s32.totalorder 1, %s9
    %p149 = scmp.lt.s32.totalorder %s9, 9
    %p150 = pnand %p148, %p149
    %p151 = pneg %p150
    // Predicated region
    $region9: #{ddconv3d_forward.2} parent=5 // pred_check
      _
    $region10: #{ddconv3d_forward.2} parent=5 // pred_check_branch
      %153 = sbr.rel (%p150) target = $region12
    $region11: #{ddconv3d_forward.2} parent=5 // pred_region
      %s154 = ssub.s32 %s9, 1
    $region12: #{ddconv3d_forward.2} parent=5 // pred_fallthru
      _
    %p155 = scmp.lt.s32.totalorder %s9, 8
    // Predicated region
    $region13: #{ddconv3d_forward.2} parent=5 // pred_check
      %p156 = pneg %p155
    $region14: #{ddconv3d_forward.2} parent=5 // pred_check_branch
      %158 = sbr.rel (%p156) target = $region16
    $region15: #{ddconv3d_forward.2} parent=5 // pred_region
      // Predicated region
      $region17: #{ddconv3d_forward.2} parent=15 // pred_check
        %p159 = pneg %p50
      $region18: #{ddconv3d_forward.2} parent=15 // pred_check_branch
        %161 = sbr.rel (%p159) target = $region20
      $region19: #{ddconv3d_forward.2} parent=15 // pred_region
        %s162 = smul.u32 4, %s17
        %p163 = scmp.lt.s32.totalorder %s16, 1
        %s164 = scalar_select %p163, %s16, 1
        %p165 = scmp.lt.s32.totalorder %s162, 15
        %s166 = scalar_select %p165, %s162, 15
        %s167 = smul.addr %s164, 16
        %s168 = sadd.s32 %s166, %s167
        %s169 = smul.addr %s168, 4
        %s170 = scalar_lea.vmem %s0, %s169
        %s171 = smul.u32 4, %s17
      $region20: #{ddconv3d_forward.2} parent=15 // pred_fallthru
        _
      // Predicated region
      $region21: #{ddconv3d_forward.2} parent=15 // pred_check
        %p172 = pneg %p78
      $region22: #{ddconv3d_forward.2} parent=15 // pred_check_branch
        %174 = sbr.rel (%p172) target = $region24
      $region23: #{ddconv3d_forward.2} parent=15 // pred_region
        %s175 = smul.u32 4, %s17
        %p176 = scmp.lt.s32.totalorder %s16, 1
        %s177 = scalar_select %p176, %s16, 1
        %p178 = scmp.lt.s32.totalorder %s175, 15
        %s179 = scalar_select %p178, %s175, 15
        %s180 = smul.addr %s177, 16
        %s181 = sadd.s32 %s179, %s180
        %s182 = smul.addr %s181, 4
        %s183 = scalar_lea.vmem %s1, %s182
        %s184 = smul.u32 4, %s17
      $region24: #{ddconv3d_forward.2} parent=15 // pred_fallthru
        _
      // Predicated region
      $region25: #{ddconv3d_forward.2} parent=15 // pred_check
        %p185 = pneg %p106
      $region26: #{ddconv3d_forward.2} parent=15 // pred_check_branch
        %187 = sbr.rel (%p185) target = $region28
      $region27: #{ddconv3d_forward.2} parent=15 // pred_region
        %s188 = smul.u32 2, %s18
        %p189 = scmp.lt.s32.totalorder %s16, 1
        %s190 = scalar_select %p189, %s16, 1
        %p191 = scmp.lt.s32.totalorder %s188, 1
        %s192 = scalar_select %p191, %s188, 1
        %s193 = smul.addr %s190, 2
        %s194 = sadd.s32 %s192, %s193
        %s195 = smul.addr %s194, 2
        %s196 = scalar_lea.vmem %s2, %s195
        %s197 = smul.u32 2, %s18
      $region28: #{ddconv3d_forward.2} parent=15 // pred_fallthru
        _
    $region16: #{ddconv3d_forward.2} parent=5 // pred_fallthru
      _
    %p198 = scmp.le.s32.totalorder 1, %s9
    %p199 = scmp.lt.s32.totalorder %s9, 9
    %p200 = pnand %p198, %p199
    %p201 = pneg %p200
    // Predicated region
    $region29: #{ddconv3d_forward.2} parent=5 // pred_check
      _
    $region30: #{ddconv3d_forward.2} parent=5 // pred_check_branch
      %203 = sbr.rel (%p200) target = $region32
    $region31: #{ddconv3d_forward.2} parent=5 // pred_region
      %s204 = ssub.s32 %s9, 1
      %s205 = smul.u32 4, %s20
      %p206 = scmp.lt.s32.totalorder %s19, 1
      %s207 = scalar_select %p206, %s19, 1
      %p208 = scmp.lt.s32.totalorder %s205, 15
      %s209 = scalar_select %p208, %s205, 15
      %s210 = smul.addr %s207, 16
      %s211 = sadd.s32 %s209, %s210
      %s212 = smul.addr %s211, 4
      %s213 = scalar_lea.vmem %s0, %s212
      %p214 = pneg %p56
      %p215 = pneg %p53
      %s216 = smul.u32 4, %s20
      %p217 = scmp.lt.s32.totalorder %s19, 1
      %s218 = scalar_select %p217, %s19, 1
      %p219 = scmp.lt.s32.totalorder %s216, 15
      %s220 = scalar_select %p219, %s216, 15
      %s221 = smul.addr %s218, 16
      %s222 = sadd.s32 %s220, %s221
      %s223 = smul.addr %s222, 4
      %s224 = scalar_lea.vmem %s1, %s223
      %p225 = pneg %p84
      %p226 = pneg %p81
      %s227 = smul.u32 2, %s21
      %p228 = scmp.lt.s32.totalorder %s19, 1
      %s229 = scalar_select %p228, %s19, 1
      %p230 = scmp.lt.s32.totalorder %s227, 1
      %s231 = scalar_select %p230, %s227, 1
      %s232 = smul.addr %s229, 2
      %s233 = sadd.s32 %s231, %s232
      %s234 = smul.addr %s233, 2
      %s235 = scalar_lea.vmem %s2, %s234
      %p236 = pneg %p112
      %p237 = pneg %p109
      %p238 = pneg %p140
      %p239 = pneg %p137
      %s240 = smul.u32 4, %s20
      %p241 = scmp.lt.s32.totalorder %s19, 1
      %s242 = scalar_select %p241, %s19, 1
      %p243 = scmp.lt.s32.totalorder %s240, 15
      %s244 = scalar_select %p243, %s240, 15
      %s245 = smul.addr %s242, 16
      %s246 = sadd.s32 %s244, %s245
      %s247 = smul.addr %s246, 4
      %s248 = scalar_lea.vmem %s3, %s247
      %s249 = smul.u32 4, %s20
      %p250 = scmp.lt.s32.totalorder %s19, 1
      %s251 = scalar_select %p250, %s19, 1
      %p252 = scmp.lt.s32.totalorder %s249, 15
      %s253 = scalar_select %p252, %s249, 15
      %s254 = smul.addr %s251, 16
      %s255 = sadd.s32 %s253, %s254
      %s256 = smul.addr %s255, 4
      %s257 = scalar_lea.vmem %s0, %s256
      %s258 = smul.u32 4, %s20
      %s259 = smul.u32 4, %s20
      %p260 = scmp.lt.s32.totalorder %s19, 1
      %s261 = scalar_select %p260, %s19, 1
      %p262 = scmp.lt.s32.totalorder %s259, 15
      %s263 = scalar_select %p262, %s259, 15
      %s264 = smul.addr %s261, 16
      %s265 = sadd.s32 %s263, %s264
      %s266 = smul.addr %s265, 4
      %s267 = scalar_lea.vmem %s1, %s266
      %s268 = smul.u32 4, %s20
      %s269 = smul.u32 2, %s21
      %p270 = scmp.lt.s32.totalorder %s19, 1
      %s271 = scalar_select %p270, %s19, 1
      %p272 = scmp.lt.s32.totalorder %s269, 1
      %s273 = scalar_select %p272, %s269, 1
      %s274 = smul.addr %s271, 2
      %s275 = sadd.s32 %s273, %s274
      %s276 = smul.addr %s275, 2
      %s277 = scalar_lea.vmem %s2, %s276
      %s278 = smul.u32 2, %s21
      %s279 = smul.u32 4, %s20
      %p280 = scmp.lt.s32.totalorder %s19, 1
      %s281 = scalar_select %p280, %s19, 1
      %p282 = scmp.lt.s32.totalorder %s279, 15
      %s283 = scalar_select %p282, %s279, 15
      %s284 = smul.addr %s281, 16
      %s285 = sadd.s32 %s283, %s284
      %s286 = smul.addr %s285, 4
      %s287 = scalar_lea.vmem %s3, %s286
      %s288 = smul.u32 4, %s20
      %p289 = scmp.eq.s32.totalorder %s21, 0
      // Predicated region
      $region33: #{ddconv3d_forward.2} parent=31 // pred_check
        %p290 = pneg %p289
      $region34: #{ddconv3d_forward.2} parent=31 // pred_check_branch
        %292 = sbr.rel (%p290) target = $region36
      $region35: #{ddconv3d_forward.2} parent=31 // pred_region
        %293 = vst [vmem:[#allocation2] sm:$0xff] 0.0
        %294 = vst [vmem:[#allocation2 + $0x8] sm:$0xff] 0.0
      $region36: #{ddconv3d_forward.2} parent=31 // pred_fallthru
        _
      %s295 = smul.u32 %s21, 256
      %v296 = vlaneseq
      %v297 = vshrl.u32 %v296, 7
      %v298 = vadd.s32 %v297, 8
      %v299 = vadd.s32 %v297, 16
      %v300 = vadd.s32 %v297, 24
      %v301 = vadd.s32 %v297, 32
      %v302 = vadd.s32 %v297, 40
      %v303 = vadd.s32 %v297, 48
      %v304 = vadd.s32 %v297, 56
      %v305 = vadd.s32 %v297, 64
      %v306 = vadd.s32 %v297, 72
      %v307 = vadd.s32 %v297, 80
      %v308 = vadd.s32 %v297, 88
      %v309 = vadd.s32 %v297, 96
      %v310 = vadd.s32 %v297, 104
      %v311 = vadd.s32 %v297, 112
      %v312 = vadd.s32 %v297, 120
      %v313 = vadd.s32 %v297, 128
      %v314 = vadd.s32 %v297, 136
      %v315 = vadd.s32 %v297, 144
      %v316 = vadd.s32 %v297, 152
      %v317 = vadd.s32 %v297, 160
      %v318 = vadd.s32 %v297, 168
      %v319 = vadd.s32 %v297, 176
      %v320 = vadd.s32 %v297, 184
      %v321 = vadd.s32 %v297, 192
      %v322 = vadd.s32 %v297, 200
      %v323 = vadd.s32 %v297, 208
      %v324 = vadd.s32 %v297, 216
      %v325 = vadd.s32 %v297, 224
      %v326 = vadd.s32 %v297, 232
      %v327 = vadd.s32 %v297, 240
      %v328 = vadd.s32 %v297, 248
      %v329 = vstv %s295
      %v330 = vadd.s32 %v297, %v329
      %v331 = vadd.s32 %v298, %v329
      %v332 = vadd.s32 %v299, %v329
      %v333 = vadd.s32 %v300, %v329
      %v334 = vadd.s32 %v301, %v329
      %v335 = vadd.s32 %v302, %v329
      %v336 = vadd.s32 %v303, %v329
      %v337 = vadd.s32 %v304, %v329
      %v338 = vadd.s32 %v305, %v329
      %v339 = vadd.s32 %v306, %v329
      %v340 = vadd.s32 %v307, %v329
      %v341 = vadd.s32 %v308, %v329
      %v342 = vadd.s32 %v309, %v329
      %v343 = vadd.s32 %v310, %v329
      %v344 = vadd.s32 %v311, %v329
      %v345 = vadd.s32 %v312, %v329
      %v346 = vadd.s32 %v313, %v329
      %v347 = vadd.s32 %v314, %v329
      %v348 = vadd.s32 %v315, %v329
      %v349 = vadd.s32 %v316, %v329
      %v350 = vadd.s32 %v317, %v329
      %v351 = vadd.s32 %v318, %v329
      %v352 = vadd.s32 %v319, %v329
      %v353 = vadd.s32 %v320, %v329
      %v354 = vadd.s32 %v321, %v329
      %v355 = vadd.s32 %v322, %v329
      %v356 = vadd.s32 %v323, %v329
      %v357 = vadd.s32 %v324, %v329
      %v358 = vadd.s32 %v325, %v329
      %v359 = vadd.s32 %v326, %v329
      %v360 = vadd.s32 %v327, %v329
      %v361 = vadd.s32 %v328, %v329
      %v362 = vld [vmem:[%s257] ss:$4 sm:$0xf]
      %v363 = vld [vmem:[%s267] ss:$4 sm:$0xf]
      %v364 = vlaneseq
      %v365 = vshrl.u32 %v364, 7
      %v366 = vsub.s32 0, %v365
      %v367 = vrot.slane %v362, %v366
      %v368 = vlaneseq
      %v369 = vshrl.u32 %v368, 7
      %v370 = vsub.s32 1, %v369
      %v371 = vrot.slane %v362, %v370
      %v372 = vlaneseq
      %v373 = vshrl.u32 %v372, 7
      %v374 = vsub.s32 2, %v373
      %v375 = vrot.slane %v362, %v374
      %v376 = vlaneseq
      %v377 = vshrl.u32 %v376, 7
      %v378 = vsub.s32 3, %v377
      %v379 = vrot.slane %v362, %v378
      %vm380 = vcmp.eq.s32.totalorder %v330, %v367
      %vm381 = vcmp.eq.s32.totalorder %v330, %v371
      %vm382 = vcmp.eq.s32.totalorder %v330, %v375
      %vm383 = vcmp.eq.s32.totalorder %v330, %v379
      %vm384 = vcmp.eq.s32.totalorder %v331, %v367
      %vm385 = vcmp.eq.s32.totalorder %v331, %v371
      %vm386 = vcmp.eq.s32.totalorder %v331, %v375
      %vm387 = vcmp.eq.s32.totalorder %v331, %v379
      %vm388 = vcmp.eq.s32.totalorder %v332, %v367
      %vm389 = vcmp.eq.s32.totalorder %v332, %v371
      %vm390 = vcmp.eq.s32.totalorder %v332, %v375
      %vm391 = vcmp.eq.s32.totalorder %v332, %v379
      %vm392 = vcmp.eq.s32.totalorder %v333, %v367
      %vm393 = vcmp.eq.s32.totalorder %v333, %v371
      %vm394 = vcmp.eq.s32.totalorder %v333, %v375
      %vm395 = vcmp.eq.s32.totalorder %v333, %v379
      %vm396 = vcmp.eq.s32.totalorder %v334, %v367
      %vm397 = vcmp.eq.s32.totalorder %v334, %v371
      %vm398 = vcmp.eq.s32.totalorder %v334, %v375
      %vm399 = vcmp.eq.s32.totalorder %v334, %v379
      %vm400 = vcmp.eq.s32.totalorder %v335, %v367
      %vm401 = vcmp.eq.s32.totalorder %v335, %v371
      %vm402 = vcmp.eq.s32.totalorder %v335, %v375
      %vm403 = vcmp.eq.s32.totalorder %v335, %v379
      %vm404 = vcmp.eq.s32.totalorder %v336, %v367
      %vm405 = vcmp.eq.s32.totalorder %v336, %v371
      %vm406 = vcmp.eq.s32.totalorder %v336, %v375
      %vm407 = vcmp.eq.s32.totalorder %v336, %v379
      %vm408 = vcmp.eq.s32.totalorder %v337, %v367
      %vm409 = vcmp.eq.s32.totalorder %v337, %v371
      %vm410 = vcmp.eq.s32.totalorder %v337, %v375
      %vm411 = vcmp.eq.s32.totalorder %v337, %v379
      %vm412 = vcmp.eq.s32.totalorder %v338, %v367
      %vm413 = vcmp.eq.s32.totalorder %v338, %v371
      %vm414 = vcmp.eq.s32.totalorder %v338, %v375
      %vm415 = vcmp.eq.s32.totalorder %v338, %v379
      %vm416 = vcmp.eq.s32.totalorder %v339, %v367
      %vm417 = vcmp.eq.s32.totalorder %v339, %v371
      %vm418 = vcmp.eq.s32.totalorder %v339, %v375
      %vm419 = vcmp.eq.s32.totalorder %v339, %v379
      %vm420 = vcmp.eq.s32.totalorder %v340, %v367
      %vm421 = vcmp.eq.s32.totalorder %v340, %v371
      %vm422 = vcmp.eq.s32.totalorder %v340, %v375
      %vm423 = vcmp.eq.s32.totalorder %v340, %v379
      %vm424 = vcmp.eq.s32.totalorder %v341, %v367
      %vm425 = vcmp.eq.s32.totalorder %v341, %v371
      %vm426 = vcmp.eq.s32.totalorder %v341, %v375
      %vm427 = vcmp.eq.s32.totalorder %v341, %v379
      %vm428 = vcmp.eq.s32.totalorder %v342, %v367
      %vm429 = vcmp.eq.s32.totalorder %v342, %v371
      %vm430 = vcmp.eq.s32.totalorder %v342, %v375
      %vm431 = vcmp.eq.s32.totalorder %v342, %v379
      %vm432 = vcmp.eq.s32.totalorder %v343, %v367
      %vm433 = vcmp.eq.s32.totalorder %v343, %v371
      %vm434 = vcmp.eq.s32.totalorder %v343, %v375
      %vm435 = vcmp.eq.s32.totalorder %v343, %v379
      %vm436 = vcmp.eq.s32.totalorder %v344, %v367
      %vm437 = vcmp.eq.s32.totalorder %v344, %v371
      %vm438 = vcmp.eq.s32.totalorder %v344, %v375
      %vm439 = vcmp.eq.s32.totalorder %v344, %v379
      %vm440 = vcmp.eq.s32.totalorder %v345, %v367
      %vm441 = vcmp.eq.s32.totalorder %v345, %v371
      %vm442 = vcmp.eq.s32.totalorder %v345, %v375
      %vm443 = vcmp.eq.s32.totalorder %v345, %v379
      %vm444 = vcmp.eq.s32.totalorder %v346, %v367
      %vm445 = vcmp.eq.s32.totalorder %v346, %v371
      %vm446 = vcmp.eq.s32.totalorder %v346, %v375
      %vm447 = vcmp.eq.s32.totalorder %v346, %v379
      %vm448 = vcmp.eq.s32.totalorder %v347, %v367
      %vm449 = vcmp.eq.s32.totalorder %v347, %v371
      %vm450 = vcmp.eq.s32.totalorder %v347, %v375
      %vm451 = vcmp.eq.s32.totalorder %v347, %v379
      %vm452 = vcmp.eq.s32.totalorder %v348, %v367
      %vm453 = vcmp.eq.s32.totalorder %v348, %v371
      %vm454 = vcmp.eq.s32.totalorder %v348, %v375
      %vm455 = vcmp.eq.s32.totalorder %v348, %v379
      %vm456 = vcmp.eq.s32.totalorder %v349, %v367
      %vm457 = vcmp.eq.s32.totalorder %v349, %v371
      %vm458 = vcmp.eq.s32.totalorder %v349, %v375
      %vm459 = vcmp.eq.s32.totalorder %v349, %v379
      %vm460 = vcmp.eq.s32.totalorder %v350, %v367
      %vm461 = vcmp.eq.s32.totalorder %v350, %v371
      %vm462 = vcmp.eq.s32.totalorder %v350, %v375
      %vm463 = vcmp.eq.s32.totalorder %v350, %v379
      %vm464 = vcmp.eq.s32.totalorder %v351, %v367
      %vm465 = vcmp.eq.s32.totalorder %v351, %v371
      %vm466 = vcmp.eq.s32.totalorder %v351, %v375
      %vm467 = vcmp.eq.s32.totalorder %v351, %v379
      %vm468 = vcmp.eq.s32.totalorder %v352, %v367
      %vm469 = vcmp.eq.s32.totalorder %v352, %v371
      %vm470 = vcmp.eq.s32.totalorder %v352, %v375
      %vm471 = vcmp.eq.s32.totalorder %v352, %v379
      %vm472 = vcmp.eq.s32.totalorder %v353, %v367
      %vm473 = vcmp.eq.s32.totalorder %v353, %v371
      %vm474 = vcmp.eq.s32.totalorder %v353, %v375
      %vm475 = vcmp.eq.s32.totalorder %v353, %v379
      %vm476 = vcmp.eq.s32.totalorder %v354, %v367
      %vm477 = vcmp.eq.s32.totalorder %v354, %v371
      %vm478 = vcmp.eq.s32.totalorder %v354, %v375
      %vm479 = vcmp.eq.s32.totalorder %v354, %v379
      %vm480 = vcmp.eq.s32.totalorder %v355, %v367
      %vm481 = vcmp.eq.s32.totalorder %v355, %v371
      %vm482 = vcmp.eq.s32.totalorder %v355, %v375
      %vm483 = vcmp.eq.s32.totalorder %v355, %v379
      %vm484 = vcmp.eq.s32.totalorder %v356, %v367
      %vm485 = vcmp.eq.s32.totalorder %v356, %v371
      %vm486 = vcmp.eq.s32.totalorder %v356, %v375
      %vm487 = vcmp.eq.s32.totalorder %v356, %v379
      %vm488 = vcmp.eq.s32.totalorder %v357, %v367
      %vm489 = vcmp.eq.s32.totalorder %v357, %v371
      %vm490 = vcmp.eq.s32.totalorder %v357, %v375
      %vm491 = vcmp.eq.s32.totalorder %v357, %v379
      %vm492 = vcmp.eq.s32.totalorder %v358, %v367
      %vm493 = vcmp.eq.s32.totalorder %v358, %v371
      %vm494 = vcmp.eq.s32.totalorder %v358, %v375
      %vm495 = vcmp.eq.s32.totalorder %v358, %v379
      %vm496 = vcmp.eq.s32.totalorder %v359, %v367
      %vm497 = vcmp.eq.s32.totalorder %v359, %v371
      %vm498 = vcmp.eq.s32.totalorder %v359, %v375
      %vm499 = vcmp.eq.s32.totalorder %v359, %v379
      %vm500 = vcmp.eq.s32.totalorder %v360, %v367
      %vm501 = vcmp.eq.s32.totalorder %v360, %v371
      %vm502 = vcmp.eq.s32.totalorder %v360, %v375
      %vm503 = vcmp.eq.s32.totalorder %v360, %v379
      %vm504 = vcmp.eq.s32.totalorder %v361, %v367
      %vm505 = vcmp.eq.s32.totalorder %v361, %v371
      %vm506 = vcmp.eq.s32.totalorder %v361, %v375
      %vm507 = vcmp.eq.s32.totalorder %v361, %v379
      %v509 = vlaneseq
      %v510 = vshrl.u32 %v509, 7
      %v511 = vsub.s32 0, %v510
      %v512 = vrot.slane %v363, %v511
      %v513 = vlaneseq
      %v514 = vshrl.u32 %v513, 7
      %v515 = vsub.s32 1, %v514
      %v516 = vrot.slane %v363, %v515
      %v517 = vlaneseq
      %v518 = vshrl.u32 %v517, 7
      %v519 = vsub.s32 2, %v518
      %v520 = vrot.slane %v363, %v519
      %v521 = vlaneseq
      %v522 = vshrl.u32 %v521, 7
      %v523 = vsub.s32 3, %v522
      %v524 = vrot.slane %v363, %v523
      %v529 = vsel %vm380, %v512, 0.0
      %v530 = vsel %vm381, %v516, 0.0
      %v531 = vsel %vm382, %v520, 0.0
      %v532 = vsel %vm383, %v524, 0.0
      %v533 = vsel %vm384, %v512, 0.0
      %v534 = vsel %vm385, %v516, 0.0
      %v535 = vsel %vm386, %v520, 0.0
      %v536 = vsel %vm387, %v524, 0.0
      %v537 = vsel %vm388, %v512, 0.0
      %v538 = vsel %vm389, %v516, 0.0
      %v539 = vsel %vm390, %v520, 0.0
      %v540 = vsel %vm391, %v524, 0.0
      %v541 = vsel %vm392, %v512, 0.0
      %v542 = vsel %vm393, %v516, 0.0
      %v543 = vsel %vm394, %v520, 0.0
      %v544 = vsel %vm395, %v524, 0.0
      %v545 = vsel %vm396, %v512, 0.0
      %v546 = vsel %vm397, %v516, 0.0
      %v547 = vsel %vm398, %v520, 0.0
      %v548 = vsel %vm399, %v524, 0.0
      %v549 = vsel %vm400, %v512, 0.0
      %v550 = vsel %vm401, %v516, 0.0
      %v551 = vsel %vm402, %v520, 0.0
      %v552 = vsel %vm403, %v524, 0.0
      %v553 = vsel %vm404, %v512, 0.0
      %v554 = vsel %vm405, %v516, 0.0
      %v555 = vsel %vm406, %v520, 0.0
      %v556 = vsel %vm407, %v524, 0.0
      %v557 = vsel %vm408, %v512, 0.0
      %v558 = vsel %vm409, %v516, 0.0
      %v559 = vsel %vm410, %v520, 0.0
      %v560 = vsel %vm411, %v524, 0.0
      %v561 = vsel %vm412, %v512, 0.0
      %v562 = vsel %vm413, %v516, 0.0
      %v563 = vsel %vm414, %v520, 0.0
      %v564 = vsel %vm415, %v524, 0.0
      %v565 = vsel %vm416, %v512, 0.0
      %v566 = vsel %vm417, %v516, 0.0
      %v567 = vsel %vm418, %v520, 0.0
      %v568 = vsel %vm419, %v524, 0.0
      %v569 = vsel %vm420, %v512, 0.0
      %v570 = vsel %vm421, %v516, 0.0
      %v571 = vsel %vm422, %v520, 0.0
      %v572 = vsel %vm423, %v524, 0.0
      %v573 = vsel %vm424, %v512, 0.0
      %v574 = vsel %vm425, %v516, 0.0
      %v575 = vsel %vm426, %v520, 0.0
      %v576 = vsel %vm427, %v524, 0.0
      %v577 = vsel %vm428, %v512, 0.0
      %v578 = vsel %vm429, %v516, 0.0
      %v579 = vsel %vm430, %v520, 0.0
      %v580 = vsel %vm431, %v524, 0.0
      %v581 = vsel %vm432, %v512, 0.0
      %v582 = vsel %vm433, %v516, 0.0
      %v583 = vsel %vm434, %v520, 0.0
      %v584 = vsel %vm435, %v524, 0.0
      %v585 = vsel %vm436, %v512, 0.0
      %v586 = vsel %vm437, %v516, 0.0
      %v587 = vsel %vm438, %v520, 0.0
      %v588 = vsel %vm439, %v524, 0.0
      %v589 = vsel %vm440, %v512, 0.0
      %v590 = vsel %vm441, %v516, 0.0
      %v591 = vsel %vm442, %v520, 0.0
      %v592 = vsel %vm443, %v524, 0.0
      %v593 = vsel %vm444, %v512, 0.0
      %v594 = vsel %vm445, %v516, 0.0
      %v595 = vsel %vm446, %v520, 0.0
      %v596 = vsel %vm447, %v524, 0.0
      %v597 = vsel %vm448, %v512, 0.0
      %v598 = vsel %vm449, %v516, 0.0
      %v599 = vsel %vm450, %v520, 0.0
      %v600 = vsel %vm451, %v524, 0.0
      %v601 = vsel %vm452, %v512, 0.0
      %v602 = vsel %vm453, %v516, 0.0
      %v603 = vsel %vm454, %v520, 0.0
      %v604 = vsel %vm455, %v524, 0.0
      %v605 = vsel %vm456, %v512, 0.0
      %v606 = vsel %vm457, %v516, 0.0
      %v607 = vsel %vm458, %v520, 0.0
      %v608 = vsel %vm459, %v524, 0.0
      %v609 = vsel %vm460, %v512, 0.0
      %v610 = vsel %vm461, %v516, 0.0
      %v611 = vsel %vm462, %v520, 0.0
      %v612 = vsel %vm463, %v524, 0.0
      %v613 = vsel %vm464, %v512, 0.0
      %v614 = vsel %vm465, %v516, 0.0
      %v615 = vsel %vm466, %v520, 0.0
      %v616 = vsel %vm467, %v524, 0.0
      %v617 = vsel %vm468, %v512, 0.0
      %v618 = vsel %vm469, %v516, 0.0
      %v619 = vsel %vm470, %v520, 0.0
      %v620 = vsel %vm471, %v524, 0.0
      %v621 = vsel %vm472, %v512, 0.0
      %v622 = vsel %vm473, %v516, 0.0
      %v623 = vsel %vm474, %v520, 0.0
      %v624 = vsel %vm475, %v524, 0.0
      %v625 = vsel %vm476, %v512, 0.0
      %v626 = vsel %vm477, %v516, 0.0
      %v627 = vsel %vm478, %v520, 0.0
      %v628 = vsel %vm479, %v524, 0.0
      %v629 = vsel %vm480, %v512, 0.0
      %v630 = vsel %vm481, %v516, 0.0
      %v631 = vsel %vm482, %v520, 0.0
      %v632 = vsel %vm483, %v524, 0.0
      %v633 = vsel %vm484, %v512, 0.0
      %v634 = vsel %vm485, %v516, 0.0
      %v635 = vsel %vm486, %v520, 0.0
      %v636 = vsel %vm487, %v524, 0.0
      %v637 = vsel %vm488, %v512, 0.0
      %v638 = vsel %vm489, %v516, 0.0
      %v639 = vsel %vm490, %v520, 0.0
      %v640 = vsel %vm491, %v524, 0.0
      %v641 = vsel %vm492, %v512, 0.0
      %v642 = vsel %vm493, %v516, 0.0
      %v643 = vsel %vm494, %v520, 0.0
      %v644 = vsel %vm495, %v524, 0.0
      %v645 = vsel %vm496, %v512, 0.0
      %v646 = vsel %vm497, %v516, 0.0
      %v647 = vsel %vm498, %v520, 0.0
      %v648 = vsel %vm499, %v524, 0.0
      %v649 = vsel %vm500, %v512, 0.0
      %v650 = vsel %vm501, %v516, 0.0
      %v651 = vsel %vm502, %v520, 0.0
      %v652 = vsel %vm503, %v524, 0.0
      %v653 = vsel %vm504, %v512, 0.0
      %v654 = vsel %vm505, %v516, 0.0
      %v655 = vsel %vm506, %v520, 0.0
      %v656 = vsel %vm507, %v524, 0.0
      %v657 = vadd.f32 %v529, 0.0
      %v658 = vadd.f32 %v530, 0.0
      %v659 = vadd.f32 %v531, 0.0
      %v660 = vadd.f32 %v532, 0.0
      %v661 = vadd.f32 %v533, 0.0
      %v662 = vadd.f32 %v534, 0.0
      %v663 = vadd.f32 %v535, 0.0
      %v664 = vadd.f32 %v536, 0.0
      %v665 = vadd.f32 %v537, 0.0
      %v666 = vadd.f32 %v538, 0.0
      %v667 = vadd.f32 %v539, 0.0
      %v668 = vadd.f32 %v540, 0.0
      %v669 = vadd.f32 %v541, 0.0
      %v670 = vadd.f32 %v542, 0.0
      %v671 = vadd.f32 %v543, 0.0
      %v672 = vadd.f32 %v544, 0.0
      %v673 = vadd.f32 %v545, 0.0
      %v674 = vadd.f32 %v546, 0.0
      %v675 = vadd.f32 %v547, 0.0
      %v676 = vadd.f32 %v548, 0.0
      %v677 = vadd.f32 %v549, 0.0
      %v678 = vadd.f32 %v550, 0.0
      %v679 = vadd.f32 %v551, 0.0
      %v680 = vadd.f32 %v552, 0.0
      %v681 = vadd.f32 %v553, 0.0
      %v682 = vadd.f32 %v554, 0.0
      %v683 = vadd.f32 %v555, 0.0
      %v684 = vadd.f32 %v556, 0.0
      %v685 = vadd.f32 %v557, 0.0
      %v686 = vadd.f32 %v558, 0.0
      %v687 = vadd.f32 %v559, 0.0
      %v688 = vadd.f32 %v560, 0.0
      %v689 = vadd.f32 %v561, 0.0
      %v690 = vadd.f32 %v562, 0.0
      %v691 = vadd.f32 %v563, 0.0
      %v692 = vadd.f32 %v564, 0.0
      %v693 = vadd.f32 %v565, 0.0
      %v694 = vadd.f32 %v566, 0.0
      %v695 = vadd.f32 %v567, 0.0
      %v696 = vadd.f32 %v568, 0.0
      %v697 = vadd.f32 %v569, 0.0
      %v698 = vadd.f32 %v570, 0.0
      %v699 = vadd.f32 %v571, 0.0
      %v700 = vadd.f32 %v572, 0.0
      %v701 = vadd.f32 %v573, 0.0
      %v702 = vadd.f32 %v574, 0.0
      %v703 = vadd.f32 %v575, 0.0
      %v704 = vadd.f32 %v576, 0.0
      %v705 = vadd.f32 %v577, 0.0
      %v706 = vadd.f32 %v578, 0.0
      %v707 = vadd.f32 %v579, 0.0
      %v708 = vadd.f32 %v580, 0.0
      %v709 = vadd.f32 %v581, 0.0
      %v710 = vadd.f32 %v582, 0.0
      %v711 = vadd.f32 %v583, 0.0
      %v712 = vadd.f32 %v584, 0.0
      %v713 = vadd.f32 %v585, 0.0
      %v714 = vadd.f32 %v586, 0.0
      %v715 = vadd.f32 %v587, 0.0
      %v716 = vadd.f32 %v588, 0.0
      %v717 = vadd.f32 %v589, 0.0
      %v718 = vadd.f32 %v590, 0.0
      %v719 = vadd.f32 %v591, 0.0
      %v720 = vadd.f32 %v592, 0.0
      %v721 = vadd.f32 %v593, 0.0
      %v722 = vadd.f32 %v594, 0.0
      %v723 = vadd.f32 %v595, 0.0
      %v724 = vadd.f32 %v596, 0.0
      %v725 = vadd.f32 %v597, 0.0
      %v726 = vadd.f32 %v598, 0.0
      %v727 = vadd.f32 %v599, 0.0
      %v728 = vadd.f32 %v600, 0.0
      %v729 = vadd.f32 %v601, 0.0
      %v730 = vadd.f32 %v602, 0.0
      %v731 = vadd.f32 %v603, 0.0
      %v732 = vadd.f32 %v604, 0.0
      %v733 = vadd.f32 %v605, 0.0
      %v734 = vadd.f32 %v606, 0.0
      %v735 = vadd.f32 %v607, 0.0
      %v736 = vadd.f32 %v608, 0.0
      %v737 = vadd.f32 %v609, 0.0
      %v738 = vadd.f32 %v610, 0.0
      %v739 = vadd.f32 %v611, 0.0
      %v740 = vadd.f32 %v612, 0.0
      %v741 = vadd.f32 %v613, 0.0
      %v742 = vadd.f32 %v614, 0.0
      %v743 = vadd.f32 %v615, 0.0
      %v744 = vadd.f32 %v616, 0.0
      %v745 = vadd.f32 %v617, 0.0
      %v746 = vadd.f32 %v618, 0.0
      %v747 = vadd.f32 %v619, 0.0
      %v748 = vadd.f32 %v620, 0.0
      %v749 = vadd.f32 %v621, 0.0
      %v750 = vadd.f32 %v622, 0.0
      %v751 = vadd.f32 %v623, 0.0
      %v752 = vadd.f32 %v624, 0.0
      %v753 = vadd.f32 %v625, 0.0
      %v754 = vadd.f32 %v626, 0.0
      %v755 = vadd.f32 %v627, 0.0
      %v756 = vadd.f32 %v628, 0.0
      %v757 = vadd.f32 %v629, 0.0
      %v758 = vadd.f32 %v630, 0.0
      %v759 = vadd.f32 %v631, 0.0
      %v760 = vadd.f32 %v632, 0.0
      %v761 = vadd.f32 %v633, 0.0
      %v762 = vadd.f32 %v634, 0.0
      %v763 = vadd.f32 %v635, 0.0
      %v764 = vadd.f32 %v636, 0.0
      %v765 = vadd.f32 %v637, 0.0
      %v766 = vadd.f32 %v638, 0.0
      %v767 = vadd.f32 %v639, 0.0
      %v768 = vadd.f32 %v640, 0.0
      %v769 = vadd.f32 %v641, 0.0
      %v770 = vadd.f32 %v642, 0.0
      %v771 = vadd.f32 %v643, 0.0
      %v772 = vadd.f32 %v644, 0.0
      %v773 = vadd.f32 %v645, 0.0
      %v774 = vadd.f32 %v646, 0.0
      %v775 = vadd.f32 %v647, 0.0
      %v776 = vadd.f32 %v648, 0.0
      %v777 = vadd.f32 %v649, 0.0
      %v778 = vadd.f32 %v650, 0.0
      %v779 = vadd.f32 %v651, 0.0
      %v780 = vadd.f32 %v652, 0.0
      %v781 = vadd.f32 %v653, 0.0
      %v782 = vadd.f32 %v654, 0.0
      %v783 = vadd.f32 %v655, 0.0
      %v784 = vadd.f32 %v656, 0.0
      %s785 = scalar_lea.vmem %s257, 1
      %v786 = vld [vmem:[%s785] ss:$4 sm:$0xf]
      %s787 = scalar_lea.vmem %s267, 1
      %v788 = vld [vmem:[%s787] ss:$4 sm:$0xf]
      %v789 = vlaneseq
      %v790 = vshrl.u32 %v789, 7
      %v791 = vsub.s32 0, %v790
      %v792 = vrot.slane %v786, %v791
      %v793 = vlaneseq
      %v794 = vshrl.u32 %v793, 7
      %v795 = vsub.s32 1, %v794
      %v796 = vrot.slane %v786, %v795
      %v797 = vlaneseq
      %v798 = vshrl.u32 %v797, 7
      %v799 = vsub.s32 2, %v798
      %v800 = vrot.slane %v786, %v799
      %v801 = vlaneseq
      %v802 = vshrl.u32 %v801, 7
      %v803 = vsub.s32 3, %v802
      %v804 = vrot.slane %v786, %v803
      %vm805 = vcmp.eq.s32.totalorder %v330, %v792
      %vm806 = vcmp.eq.s32.totalorder %v330, %v796
      %vm807 = vcmp.eq.s32.totalorder %v330, %v800
      %vm808 = vcmp.eq.s32.totalorder %v330, %v804
      %vm809 = vcmp.eq.s32.totalorder %v331, %v792
      %vm810 = vcmp.eq.s32.totalorder %v331, %v796
      %vm811 = vcmp.eq.s32.totalorder %v331, %v800
      %vm812 = vcmp.eq.s32.totalorder %v331, %v804
      %vm813 = vcmp.eq.s32.totalorder %v332, %v792
      %vm814 = vcmp.eq.s32.totalorder %v332, %v796
      %vm815 = vcmp.eq.s32.totalorder %v332, %v800
      %vm816 = vcmp.eq.s32.totalorder %v332, %v804
      %vm817 = vcmp.eq.s32.totalorder %v333, %v792
      %vm818 = vcmp.eq.s32.totalorder %v333, %v796
      %vm819 = vcmp.eq.s32.totalorder %v333, %v800
      %vm820 = vcmp.eq.s32.totalorder %v333, %v804
      %vm821 = vcmp.eq.s32.totalorder %v334, %v792
      %vm822 = vcmp.eq.s32.totalorder %v334, %v796
      %vm823 = vcmp.eq.s32.totalorder %v334, %v800
      %vm824 = vcmp.eq.s32.totalorder %v334, %v804
      %vm825 = vcmp.eq.s32.totalorder %v335, %v792
      %vm826 = vcmp.eq.s32.totalorder %v335, %v796
      %vm827 = vcmp.eq.s32.totalorder %v335, %v800
      %vm828 = vcmp.eq.s32.totalorder %v335, %v804
      %vm829 = vcmp.eq.s32.totalorder %v336, %v792
      %vm830 = vcmp.eq.s32.totalorder %v336, %v796
      %vm831 = vcmp.eq.s32.totalorder %v336, %v800
      %vm832 = vcmp.eq.s32.totalorder %v336, %v804
      %vm833 = vcmp.eq.s32.totalorder %v337, %v792
      %vm834 = vcmp.eq.s32.totalorder %v337, %v796
      %vm835 = vcmp.eq.s32.totalorder %v337, %v800
      %vm836 = vcmp.eq.s32.totalorder %v337, %v804
      %vm837 = vcmp.eq.s32.totalorder %v338, %v792
      %vm838 = vcmp.eq.s32.totalorder %v338, %v796
      %vm839 = vcmp.eq.s32.totalorder %v338, %v800
      %vm840 = vcmp.eq.s32.totalorder %v338, %v804
      %vm841 = vcmp.eq.s32.totalorder %v339, %v792
      %vm842 = vcmp.eq.s32.totalorder %v339, %v796
      %vm843 = vcmp.eq.s32.totalorder %v339, %v800
      %vm844 = vcmp.eq.s32.totalorder %v339, %v804
      %vm845 = vcmp.eq.s32.totalorder %v340, %v792
      %vm846 = vcmp.eq.s32.totalorder %v340, %v796
      %vm847 = vcmp.eq.s32.totalorder %v340, %v800
      %vm848 = vcmp.eq.s32.totalorder %v340, %v804
      %vm849 = vcmp.eq.s32.totalorder %v341, %v792
      %vm850 = vcmp.eq.s32.totalorder %v341, %v796
      %vm851 = vcmp.eq.s32.totalorder %v341, %v800
      %vm852 = vcmp.eq.s32.totalorder %v341, %v804
      %vm853 = vcmp.eq.s32.totalorder %v342, %v792
      %vm854 = vcmp.eq.s32.totalorder %v342, %v796
      %vm855 = vcmp.eq.s32.totalorder %v342, %v800
      %vm856 = vcmp.eq.s32.totalorder %v342, %v804
      %vm857 = vcmp.eq.s32.totalorder %v343, %v792
      %vm858 = vcmp.eq.s32.totalorder %v343, %v796
      %vm859 = vcmp.eq.s32.totalorder %v343, %v800
      %vm860 = vcmp.eq.s32.totalorder %v343, %v804
      %vm861 = vcmp.eq.s32.totalorder %v344, %v792
      %vm862 = vcmp.eq.s32.totalorder %v344, %v796
      %vm863 = vcmp.eq.s32.totalorder %v344, %v800
      %vm864 = vcmp.eq.s32.totalorder %v344, %v804
      %vm865 = vcmp.eq.s32.totalorder %v345, %v792
      %vm866 = vcmp.eq.s32.totalorder %v345, %v796
      %vm867 = vcmp.eq.s32.totalorder %v345, %v800
      %vm868 = vcmp.eq.s32.totalorder %v345, %v804
      %vm869 = vcmp.eq.s32.totalorder %v346, %v792
      %vm870 = vcmp.eq.s32.totalorder %v346, %v796
      %vm871 = vcmp.eq.s32.totalorder %v346, %v800
      %vm872 = vcmp.eq.s32.totalorder %v346, %v804
      %vm873 = vcmp.eq.s32.totalorder %v347, %v792
      %vm874 = vcmp.eq.s32.totalorder %v347, %v796
      %vm875 = vcmp.eq.s32.totalorder %v347, %v800
      %vm876 = vcmp.eq.s32.totalorder %v347, %v804
      %vm877 = vcmp.eq.s32.totalorder %v348, %v792
      %vm878 = vcmp.eq.s32.totalorder %v348, %v796
      %vm879 = vcmp.eq.s32.totalorder %v348, %v800
      %vm880 = vcmp.eq.s32.totalorder %v348, %v804
      %vm881 = vcmp.eq.s32.totalorder %v349, %v792
      %vm882 = vcmp.eq.s32.totalorder %v349, %v796
      %vm883 = vcmp.eq.s32.totalorder %v349, %v800
      %vm884 = vcmp.eq.s32.totalorder %v349, %v804
      %vm885 = vcmp.eq.s32.totalorder %v350, %v792
      %vm886 = vcmp.eq.s32.totalorder %v350, %v796
      %vm887 = vcmp.eq.s32.totalorder %v350, %v800
      %vm888 = vcmp.eq.s32.totalorder %v350, %v804
      %vm889 = vcmp.eq.s32.totalorder %v351, %v792
      %vm890 = vcmp.eq.s32.totalorder %v351, %v796
      %vm891 = vcmp.eq.s32.totalorder %v351, %v800
      %vm892 = vcmp.eq.s32.totalorder %v351, %v804
      %vm893 = vcmp.eq.s32.totalorder %v352, %v792
      %vm894 = vcmp.eq.s32.totalorder %v352, %v796
      %vm895 = vcmp.eq.s32.totalorder %v352, %v800
      %vm896 = vcmp.eq.s32.totalorder %v352, %v804
      %vm897 = vcmp.eq.s32.totalorder %v353, %v792
      %vm898 = vcmp.eq.s32.totalorder %v353, %v796
      %vm899 = vcmp.eq.s32.totalorder %v353, %v800
      %vm900 = vcmp.eq.s32.totalorder %v353, %v804
      %vm901 = vcmp.eq.s32.totalorder %v354, %v792
      %vm902 = vcmp.eq.s32.totalorder %v354, %v796
      %vm903 = vcmp.eq.s32.totalorder %v354, %v800
      %vm904 = vcmp.eq.s32.totalorder %v354, %v804
      %vm905 = vcmp.eq.s32.totalorder %v355, %v792
      %vm906 = vcmp.eq.s32.totalorder %v355, %v796
      %vm907 = vcmp.eq.s32.totalorder %v355, %v800
      %vm908 = vcmp.eq.s32.totalorder %v355, %v804
      %vm909 = vcmp.eq.s32.totalorder %v356, %v792
      %vm910 = vcmp.eq.s32.totalorder %v356, %v796
      %vm911 = vcmp.eq.s32.totalorder %v356, %v800
      %vm912 = vcmp.eq.s32.totalorder %v356, %v804
      %vm913 = vcmp.eq.s32.totalorder %v357, %v792
      %vm914 = vcmp.eq.s32.totalorder %v357, %v796
      %vm915 = vcmp.eq.s32.totalorder %v357, %v800
      %vm916 = vcmp.eq.s32.totalorder %v357, %v804
      %vm917 = vcmp.eq.s32.totalorder %v358, %v792
      %vm918 = vcmp.eq.s32.totalorder %v358, %v796
      %vm919 = vcmp.eq.s32.totalorder %v358, %v800
      %vm920 = vcmp.eq.s32.totalorder %v358, %v804
      %vm921 = vcmp.eq.s32.totalorder %v359, %v792
      %vm922 = vcmp.eq.s32.totalorder %v359, %v796
      %vm923 = vcmp.eq.s32.totalorder %v359, %v800
      %vm924 = vcmp.eq.s32.totalorder %v359, %v804
      %vm925 = vcmp.eq.s32.totalorder %v360, %v792
      %vm926 = vcmp.eq.s32.totalorder %v360, %v796
      %vm927 = vcmp.eq.s32.totalorder %v360, %v800
      %vm928 = vcmp.eq.s32.totalorder %v360, %v804
      %vm929 = vcmp.eq.s32.totalorder %v361, %v792
      %vm930 = vcmp.eq.s32.totalorder %v361, %v796
      %vm931 = vcmp.eq.s32.totalorder %v361, %v800
      %vm932 = vcmp.eq.s32.totalorder %v361, %v804
      %v934 = vlaneseq
      %v935 = vshrl.u32 %v934, 7
      %v936 = vsub.s32 0, %v935
      %v937 = vrot.slane %v788, %v936
      %v938 = vlaneseq
      %v939 = vshrl.u32 %v938, 7
      %v940 = vsub.s32 1, %v939
      %v941 = vrot.slane %v788, %v940
      %v942 = vlaneseq
      %v943 = vshrl.u32 %v942, 7
      %v944 = vsub.s32 2, %v943
      %v945 = vrot.slane %v788, %v944
      %v946 = vlaneseq
      %v947 = vshrl.u32 %v946, 7
      %v948 = vsub.s32 3, %v947
      %v949 = vrot.slane %v788, %v948
      %v954 = vsel %vm805, %v937, 0.0
      %v955 = vsel %vm806, %v941, 0.0
      %v956 = vsel %vm807, %v945, 0.0
      %v957 = vsel %vm808, %v949, 0.0
      %v958 = vsel %vm809, %v937, 0.0
      %v959 = vsel %vm810, %v941, 0.0
      %v960 = vsel %vm811, %v945, 0.0
      %v961 = vsel %vm812, %v949, 0.0
      %v962 = vsel %vm813, %v937, 0.0
      %v963 = vsel %vm814, %v941, 0.0
      %v964 = vsel %vm815, %v945, 0.0
      %v965 = vsel %vm816, %v949, 0.0
      %v966 = vsel %vm817, %v937, 0.0
      %v967 = vsel %vm818, %v941, 0.0
      %v968 = vsel %vm819, %v945, 0.0
      %v969 = vsel %vm820, %v949, 0.0
      %v970 = vsel %vm821, %v937, 0.0
      %v971 = vsel %vm822, %v941, 0.0
      %v972 = vsel %vm823, %v945, 0.0
      %v973 = vsel %vm824, %v949, 0.0
      %v974 = vsel %vm825, %v937, 0.0
      %v975 = vsel %vm826, %v941, 0.0
      %v976 = vsel %vm827, %v945, 0.0
      %v977 = vsel %vm828, %v949, 0.0
      %v978 = vsel %vm829, %v937, 0.0
      %v979 = vsel %vm830, %v941, 0.0
      %v980 = vsel %vm831, %v945, 0.0
      %v981 = vsel %vm832, %v949, 0.0
      %v982 = vsel %vm833, %v937, 0.0
      %v983 = vsel %vm834, %v941, 0.0
      %v984 = vsel %vm835, %v945, 0.0
      %v985 = vsel %vm836, %v949, 0.0
      %v986 = vsel %vm837, %v937, 0.0
      %v987 = vsel %vm838, %v941, 0.0
      %v988 = vsel %vm839, %v945, 0.0
      %v989 = vsel %vm840, %v949, 0.0
      %v990 = vsel %vm841, %v937, 0.0
      %v991 = vsel %vm842, %v941, 0.0
      %v992 = vsel %vm843, %v945, 0.0
      %v993 = vsel %vm844, %v949, 0.0
      %v994 = vsel %vm845, %v937, 0.0
      %v995 = vsel %vm846, %v941, 0.0
      %v996 = vsel %vm847, %v945, 0.0
      %v997 = vsel %vm848, %v949, 0.0
      %v998 = vsel %vm849, %v937, 0.0
      %v999 = vsel %vm850, %v941, 0.0
      %v1000 = vsel %vm851, %v945, 0.0
      %v1001 = vsel %vm852, %v949, 0.0
      %v1002 = vsel %vm853, %v937, 0.0
      %v1003 = vsel %vm854, %v941, 0.0
      %v1004 = vsel %vm855, %v945, 0.0
      %v1005 = vsel %vm856, %v949, 0.0
      %v1006 = vsel %vm857, %v937, 0.0
      %v1007 = vsel %vm858, %v941, 0.0
      %v1008 = vsel %vm859, %v945, 0.0
      %v1009 = vsel %vm860, %v949, 0.0
      %v1010 = vsel %vm861, %v937, 0.0
      %v1011 = vsel %vm862, %v941, 0.0
      %v1012 = vsel %vm863, %v945, 0.0
      %v1013 = vsel %vm864, %v949, 0.0
      %v1014 = vsel %vm865, %v937, 0.0
      %v1015 = vsel %vm866, %v941, 0.0
      %v1016 = vsel %vm867, %v945, 0.0
      %v1017 = vsel %vm868, %v949, 0.0
      %v1018 = vsel %vm869, %v937, 0.0
      %v1019 = vsel %vm870, %v941, 0.0
      %v1020 = vsel %vm871, %v945, 0.0
      %v1021 = vsel %vm872, %v949, 0.0
      %v1022 = vsel %vm873, %v937, 0.0
      %v1023 = vsel %vm874, %v941, 0.0
      %v1024 = vsel %vm875, %v945, 0.0
      %v1025 = vsel %vm876, %v949, 0.0
      %v1026 = vsel %vm877, %v937, 0.0
      %v1027 = vsel %vm878, %v941, 0.0
      %v1028 = vsel %vm879, %v945, 0.0
      %v1029 = vsel %vm880, %v949, 0.0
      %v1030 = vsel %vm881, %v937, 0.0
      %v1031 = vsel %vm882, %v941, 0.0
      %v1032 = vsel %vm883, %v945, 0.0
      %v1033 = vsel %vm884, %v949, 0.0
      %v1034 = vsel %vm885, %v937, 0.0
      %v1035 = vsel %vm886, %v941, 0.0
      %v1036 = vsel %vm887, %v945, 0.0
      %v1037 = vsel %vm888, %v949, 0.0
      %v1038 = vsel %vm889, %v937, 0.0
      %v1039 = vsel %vm890, %v941, 0.0
      %v1040 = vsel %vm891, %v945, 0.0
      %v1041 = vsel %vm892, %v949, 0.0
      %v1042 = vsel %vm893, %v937, 0.0
      %v1043 = vsel %vm894, %v941, 0.0
      %v1044 = vsel %vm895, %v945, 0.0
      %v1045 = vsel %vm896, %v949, 0.0
      %v1046 = vsel %vm897, %v937, 0.0
      %v1047 = vsel %vm898, %v941, 0.0
      %v1048 = vsel %vm899, %v945, 0.0
      %v1049 = vsel %vm900, %v949, 0.0
      %v1050 = vsel %vm901, %v937, 0.0
      %v1051 = vsel %vm902, %v941, 0.0
      %v1052 = vsel %vm903, %v945, 0.0
      %v1053 = vsel %vm904, %v949, 0.0
      %v1054 = vsel %vm905, %v937, 0.0
      %v1055 = vsel %vm906, %v941, 0.0
      %v1056 = vsel %vm907, %v945, 0.0
      %v1057 = vsel %vm908, %v949, 0.0
      %v1058 = vsel %vm909, %v937, 0.0
      %v1059 = vsel %vm910, %v941, 0.0
      %v1060 = vsel %vm911, %v945, 0.0
      %v1061 = vsel %vm912, %v949, 0.0
      %v1062 = vsel %vm913, %v937, 0.0
      %v1063 = vsel %vm914, %v941, 0.0
      %v1064 = vsel %vm915, %v945, 0.0
      %v1065 = vsel %vm916, %v949, 0.0
      %v1066 = vsel %vm917, %v937, 0.0
      %v1067 = vsel %vm918, %v941, 0.0
      %v1068 = vsel %vm919, %v945, 0.0
      %v1069 = vsel %vm920, %v949, 0.0
      %v1070 = vsel %vm921, %v937, 0.0
      %v1071 = vsel %vm922, %v941, 0.0
      %v1072 = vsel %vm923, %v945, 0.0
      %v1073 = vsel %vm924, %v949, 0.0
      %v1074 = vsel %vm925, %v937, 0.0
      %v1075 = vsel %vm926, %v941, 0.0
      %v1076 = vsel %vm927, %v945, 0.0
      %v1077 = vsel %vm928, %v949, 0.0
      %v1078 = vsel %vm929, %v937, 0.0
      %v1079 = vsel %vm930, %v941, 0.0
      %v1080 = vsel %vm931, %v945, 0.0
      %v1081 = vsel %vm932, %v949, 0.0
      %v1082 = vadd.f32 %v657, %v954
      %v1083 = vadd.f32 %v658, %v955
      %v1084 = vadd.f32 %v659, %v956
      %v1085 = vadd.f32 %v660, %v957
      %v1086 = vadd.f32 %v661, %v958
      %v1087 = vadd.f32 %v662, %v959
      %v1088 = vadd.f32 %v663, %v960
      %v1089 = vadd.f32 %v664, %v961
      %v1090 = vadd.f32 %v665, %v962
      %v1091 = vadd.f32 %v666, %v963
      %v1092 = vadd.f32 %v667, %v964
      %v1093 = vadd.f32 %v668, %v965
      %v1094 = vadd.f32 %v669, %v966
      %v1095 = vadd.f32 %v670, %v967
      %v1096 = vadd.f32 %v671, %v968
      %v1097 = vadd.f32 %v672, %v969
      %v1098 = vadd.f32 %v673, %v970
      %v1099 = vadd.f32 %v674, %v971
      %v1100 = vadd.f32 %v675, %v972
      %v1101 = vadd.f32 %v676, %v973
      %v1102 = vadd.f32 %v677, %v974
      %v1103 = vadd.f32 %v678, %v975
      %v1104 = vadd.f32 %v679, %v976
      %v1105 = vadd.f32 %v680, %v977
      %v1106 = vadd.f32 %v681, %v978
      %v1107 = vadd.f32 %v682, %v979
      %v1108 = vadd.f32 %v683, %v980
      %v1109 = vadd.f32 %v684, %v981
      %v1110 = vadd.f32 %v685, %v982
      %v1111 = vadd.f32 %v686, %v983
      %v1112 = vadd.f32 %v687, %v984
      %v1113 = vadd.f32 %v688, %v985
      %v1114 = vadd.f32 %v689, %v986
      %v1115 = vadd.f32 %v690, %v987
      %v1116 = vadd.f32 %v691, %v988
      %v1117 = vadd.f32 %v692, %v989
      %v1118 = vadd.f32 %v693, %v990
      %v1119 = vadd.f32 %v694, %v991
      %v1120 = vadd.f32 %v695, %v992
      %v1121 = vadd.f32 %v696, %v993
      %v1122 = vadd.f32 %v697, %v994
      %v1123 = vadd.f32 %v698, %v995
      %v1124 = vadd.f32 %v699, %v996
      %v1125 = vadd.f32 %v700, %v997
      %v1126 = vadd.f32 %v701, %v998
      %v1127 = vadd.f32 %v702, %v999
      %v1128 = vadd.f32 %v703, %v1000
      %v1129 = vadd.f32 %v704, %v1001
      %v1130 = vadd.f32 %v705, %v1002
      %v1131 = vadd.f32 %v706, %v1003
      %v1132 = vadd.f32 %v707, %v1004
      %v1133 = vadd.f32 %v708, %v1005
      %v1134 = vadd.f32 %v709, %v1006
      %v1135 = vadd.f32 %v710, %v1007
      %v1136 = vadd.f32 %v711, %v1008
      %v1137 = vadd.f32 %v712, %v1009
      %v1138 = vadd.f32 %v713, %v1010
      %v1139 = vadd.f32 %v714, %v1011
      %v1140 = vadd.f32 %v715, %v1012
      %v1141 = vadd.f32 %v716, %v1013
      %v1142 = vadd.f32 %v717, %v1014
      %v1143 = vadd.f32 %v718, %v1015
      %v1144 = vadd.f32 %v719, %v1016
      %v1145 = vadd.f32 %v720, %v1017
      %v1146 = vadd.f32 %v721, %v1018
      %v1147 = vadd.f32 %v722, %v1019
      %v1148 = vadd.f32 %v723, %v1020
      %v1149 = vadd.f32 %v724, %v1021
      %v1150 = vadd.f32 %v725, %v1022
      %v1151 = vadd.f32 %v726, %v1023
      %v1152 = vadd.f32 %v727, %v1024
      %v1153 = vadd.f32 %v728, %v1025
      %v1154 = vadd.f32 %v729, %v1026
      %v1155 = vadd.f32 %v730, %v1027
      %v1156 = vadd.f32 %v731, %v1028
      %v1157 = vadd.f32 %v732, %v1029
      %v1158 = vadd.f32 %v733, %v1030
      %v1159 = vadd.f32 %v734, %v1031
      %v1160 = vadd.f32 %v735, %v1032
      %v1161 = vadd.f32 %v736, %v1033
      %v1162 = vadd.f32 %v737, %v1034
      %v1163 = vadd.f32 %v738, %v1035
      %v1164 = vadd.f32 %v739, %v1036
      %v1165 = vadd.f32 %v740, %v1037
      %v1166 = vadd.f32 %v741, %v1038
      %v1167 = vadd.f32 %v742, %v1039
      %v1168 = vadd.f32 %v743, %v1040
      %v1169 = vadd.f32 %v744, %v1041
      %v1170 = vadd.f32 %v745, %v1042
      %v1171 = vadd.f32 %v746, %v1043
      %v1172 = vadd.f32 %v747, %v1044
      %v1173 = vadd.f32 %v748, %v1045
      %v1174 = vadd.f32 %v749, %v1046
      %v1175 = vadd.f32 %v750, %v1047
      %v1176 = vadd.f32 %v751, %v1048
      %v1177 = vadd.f32 %v752, %v1049
      %v1178 = vadd.f32 %v753, %v1050
      %v1179 = vadd.f32 %v754, %v1051
      %v1180 = vadd.f32 %v755, %v1052
      %v1181 = vadd.f32 %v756, %v1053
      %v1182 = vadd.f32 %v757, %v1054
      %v1183 = vadd.f32 %v758, %v1055
      %v1184 = vadd.f32 %v759, %v1056
      %v1185 = vadd.f32 %v760, %v1057
      %v1186 = vadd.f32 %v761, %v1058
      %v1187 = vadd.f32 %v762, %v1059
      %v1188 = vadd.f32 %v763, %v1060
      %v1189 = vadd.f32 %v764, %v1061
      %v1190 = vadd.f32 %v765, %v1062
      %v1191 = vadd.f32 %v766, %v1063
      %v1192 = vadd.f32 %v767, %v1064
      %v1193 = vadd.f32 %v768, %v1065
      %v1194 = vadd.f32 %v769, %v1066
      %v1195 = vadd.f32 %v770, %v1067
      %v1196 = vadd.f32 %v771, %v1068
      %v1197 = vadd.f32 %v772, %v1069
      %v1198 = vadd.f32 %v773, %v1070
      %v1199 = vadd.f32 %v774, %v1071
      %v1200 = vadd.f32 %v775, %v1072
      %v1201 = vadd.f32 %v776, %v1073
      %v1202 = vadd.f32 %v777, %v1074
      %v1203 = vadd.f32 %v778, %v1075
      %v1204 = vadd.f32 %v779, %v1076
      %v1205 = vadd.f32 %v780, %v1077
      %v1206 = vadd.f32 %v781, %v1078
      %v1207 = vadd.f32 %v782, %v1079
      %v1208 = vadd.f32 %v783, %v1080
      %v1209 = vadd.f32 %v784, %v1081
      %s1210 = scalar_lea.vmem %s257, 2
      %v1211 = vld [vmem:[%s1210] ss:$4 sm:$0xf]
      %s1212 = scalar_lea.vmem %s267, 2
      %v1213 = vld [vmem:[%s1212] ss:$4 sm:$0xf]
      %v1214 = vlaneseq
      %v1215 = vshrl.u32 %v1214, 7
      %v1216 = vsub.s32 0, %v1215
      %v1217 = vrot.slane %v1211, %v1216
      %v1218 = vlaneseq
      %v1219 = vshrl.u32 %v1218, 7
      %v1220 = vsub.s32 1, %v1219
      %v1221 = vrot.slane %v1211, %v1220
      %v1222 = vlaneseq
      %v1223 = vshrl.u32 %v1222, 7
      %v1224 = vsub.s32 2, %v1223
      %v1225 = vrot.slane %v1211, %v1224
      %v1226 = vlaneseq
      %v1227 = vshrl.u32 %v1226, 7
      %v1228 = vsub.s32 3, %v1227
      %v1229 = vrot.slane %v1211, %v1228
      %vm1230 = vcmp.eq.s32.totalorder %v330, %v1217
      %vm1231 = vcmp.eq.s32.totalorder %v330, %v1221
      %vm1232 = vcmp.eq.s32.totalorder %v330, %v1225
      %vm1233 = vcmp.eq.s32.totalorder %v330, %v1229
      %vm1234 = vcmp.eq.s32.totalorder %v331, %v1217
      %vm1235 = vcmp.eq.s32.totalorder %v331, %v1221
      %vm1236 = vcmp.eq.s32.totalorder %v331, %v1225
      %vm1237 = vcmp.eq.s32.totalorder %v331, %v1229
      %vm1238 = vcmp.eq.s32.totalorder %v332, %v1217
      %vm1239 = vcmp.eq.s32.totalorder %v332, %v1221
      %vm1240 = vcmp.eq.s32.totalorder %v332, %v1225
      %vm1241 = vcmp.eq.s32.totalorder %v332, %v1229
      %vm1242 = vcmp.eq.s32.totalorder %v333, %v1217
      %vm1243 = vcmp.eq.s32.totalorder %v333, %v1221
      %vm1244 = vcmp.eq.s32.totalorder %v333, %v1225
      %vm1245 = vcmp.eq.s32.totalorder %v333, %v1229
      %vm1246 = vcmp.eq.s32.totalorder %v334, %v1217
      %vm1247 = vcmp.eq.s32.totalorder %v334, %v1221
      %vm1248 = vcmp.eq.s32.totalorder %v334, %v1225
      %vm1249 = vcmp.eq.s32.totalorder %v334, %v1229
      %vm1250 = vcmp.eq.s32.totalorder %v335, %v1217
      %vm1251 = vcmp.eq.s32.totalorder %v335, %v1221
      %vm1252 = vcmp.eq.s32.totalorder %v335, %v1225
      %vm1253 = vcmp.eq.s32.totalorder %v335, %v1229
      %vm1254 = vcmp.eq.s32.totalorder %v336, %v1217
      %vm1255 = vcmp.eq.s32.totalorder %v336, %v1221
      %vm1256 = vcmp.eq.s32.totalorder %v336, %v1225
      %vm1257 = vcmp.eq.s32.totalorder %v336, %v1229
      %vm1258 = vcmp.eq.s32.totalorder %v337, %v1217
      %vm1259 = vcmp.eq.s32.totalorder %v337, %v1221
      %vm1260 = vcmp.eq.s32.totalorder %v337, %v1225
      %vm1261 = vcmp.eq.s32.totalorder %v337, %v1229
      %vm1262 = vcmp.eq.s32.totalorder %v338, %v1217
      %vm1263 = vcmp.eq.s32.totalorder %v338, %v1221
      %vm1264 = vcmp.eq.s32.totalorder %v338, %v1225
      %vm1265 = vcmp.eq.s32.totalorder %v338, %v1229
      %vm1266 = vcmp.eq.s32.totalorder %v339, %v1217
      %vm1267 = vcmp.eq.s32.totalorder %v339, %v1221
      %vm1268 = vcmp.eq.s32.totalorder %v339, %v1225
      %vm1269 = vcmp.eq.s32.totalorder %v339, %v1229
      %vm1270 = vcmp.eq.s32.totalorder %v340, %v1217
      %vm1271 = vcmp.eq.s32.totalorder %v340, %v1221
      %vm1272 = vcmp.eq.s32.totalorder %v340, %v1225
      %vm1273 = vcmp.eq.s32.totalorder %v340, %v1229
      %vm1274 = vcmp.eq.s32.totalorder %v341, %v1217
      %vm1275 = vcmp.eq.s32.totalorder %v341, %v1221
      %vm1276 = vcmp.eq.s32.totalorder %v341, %v1225
      %vm1277 = vcmp.eq.s32.totalorder %v341, %v1229
      %vm1278 = vcmp.eq.s32.totalorder %v342, %v1217
      %vm1279 = vcmp.eq.s32.totalorder %v342, %v1221
      %vm1280 = vcmp.eq.s32.totalorder %v342, %v1225
      %vm1281 = vcmp.eq.s32.totalorder %v342, %v1229
      %vm1282 = vcmp.eq.s32.totalorder %v343, %v1217
      %vm1283 = vcmp.eq.s32.totalorder %v343, %v1221
      %vm1284 = vcmp.eq.s32.totalorder %v343, %v1225
      %vm1285 = vcmp.eq.s32.totalorder %v343, %v1229
      %vm1286 = vcmp.eq.s32.totalorder %v344, %v1217
      %vm1287 = vcmp.eq.s32.totalorder %v344, %v1221
      %vm1288 = vcmp.eq.s32.totalorder %v344, %v1225
      %vm1289 = vcmp.eq.s32.totalorder %v344, %v1229
      %vm1290 = vcmp.eq.s32.totalorder %v345, %v1217
      %vm1291 = vcmp.eq.s32.totalorder %v345, %v1221
      %vm1292 = vcmp.eq.s32.totalorder %v345, %v1225
      %vm1293 = vcmp.eq.s32.totalorder %v345, %v1229
      %vm1294 = vcmp.eq.s32.totalorder %v346, %v1217
      %vm1295 = vcmp.eq.s32.totalorder %v346, %v1221
      %vm1296 = vcmp.eq.s32.totalorder %v346, %v1225
      %vm1297 = vcmp.eq.s32.totalorder %v346, %v1229
      %vm1298 = vcmp.eq.s32.totalorder %v347, %v1217
      %vm1299 = vcmp.eq.s32.totalorder %v347, %v1221
      %vm1300 = vcmp.eq.s32.totalorder %v347, %v1225
      %vm1301 = vcmp.eq.s32.totalorder %v347, %v1229
      %vm1302 = vcmp.eq.s32.totalorder %v348, %v1217
      %vm1303 = vcmp.eq.s32.totalorder %v348, %v1221
      %vm1304 = vcmp.eq.s32.totalorder %v348, %v1225
      %vm1305 = vcmp.eq.s32.totalorder %v348, %v1229
      %vm1306 = vcmp.eq.s32.totalorder %v349, %v1217
      %vm1307 = vcmp.eq.s32.totalorder %v349, %v1221
      %vm1308 = vcmp.eq.s32.totalorder %v349, %v1225
      %vm1309 = vcmp.eq.s32.totalorder %v349, %v1229
      %vm1310 = vcmp.eq.s32.totalorder %v350, %v1217
      %vm1311 = vcmp.eq.s32.totalorder %v350, %v1221
      %vm1312 = vcmp.eq.s32.totalorder %v350, %v1225
      %vm1313 = vcmp.eq.s32.totalorder %v350, %v1229
      %vm1314 = vcmp.eq.s32.totalorder %v351, %v1217
      %vm1315 = vcmp.eq.s32.totalorder %v351, %v1221
      %vm1316 = vcmp.eq.s32.totalorder %v351, %v1225
      %vm1317 = vcmp.eq.s32.totalorder %v351, %v1229
      %vm1318 = vcmp.eq.s32.totalorder %v352, %v1217
      %vm1319 = vcmp.eq.s32.totalorder %v352, %v1221
      %vm1320 = vcmp.eq.s32.totalorder %v352, %v1225
      %vm1321 = vcmp.eq.s32.totalorder %v352, %v1229
      %vm1322 = vcmp.eq.s32.totalorder %v353, %v1217
      %vm1323 = vcmp.eq.s32.totalorder %v353, %v1221
      %vm1324 = vcmp.eq.s32.totalorder %v353, %v1225
      %vm1325 = vcmp.eq.s32.totalorder %v353, %v1229
      %vm1326 = vcmp.eq.s32.totalorder %v354, %v1217
      %vm1327 = vcmp.eq.s32.totalorder %v354, %v1221
      %vm1328 = vcmp.eq.s32.totalorder %v354, %v1225
      %vm1329 = vcmp.eq.s32.totalorder %v354, %v1229
      %vm1330 = vcmp.eq.s32.totalorder %v355, %v1217
      %vm1331 = vcmp.eq.s32.totalorder %v355, %v1221
      %vm1332 = vcmp.eq.s32.totalorder %v355, %v1225
      %vm1333 = vcmp.eq.s32.totalorder %v355, %v1229
      %vm1334 = vcmp.eq.s32.totalorder %v356, %v1217
      %vm1335 = vcmp.eq.s32.totalorder %v356, %v1221
      %vm1336 = vcmp.eq.s32.totalorder %v356, %v1225
      %vm1337 = vcmp.eq.s32.totalorder %v356, %v1229
      %vm1338 = vcmp.eq.s32.totalorder %v357, %v1217
      %vm1339 = vcmp.eq.s32.totalorder %v357, %v1221
      %vm1340 = vcmp.eq.s32.totalorder %v357, %v1225
      %vm1341 = vcmp.eq.s32.totalorder %v357, %v1229
      %vm1342 = vcmp.eq.s32.totalorder %v358, %v1217
      %vm1343 = vcmp.eq.s32.totalorder %v358, %v1221
      %vm1344 = vcmp.eq.s32.totalorder %v358, %v1225
      %vm1345 = vcmp.eq.s32.totalorder %v358, %v1229
      %vm1346 = vcmp.eq.s32.totalorder %v359, %v1217
      %vm1347 = vcmp.eq.s32.totalorder %v359, %v1221
      %vm1348 = vcmp.eq.s32.totalorder %v359, %v1225
      %vm1349 = vcmp.eq.s32.totalorder %v359, %v1229
      %vm1350 = vcmp.eq.s32.totalorder %v360, %v1217
      %vm1351 = vcmp.eq.s32.totalorder %v360, %v1221
      %vm1352 = vcmp.eq.s32.totalorder %v360, %v1225
      %vm1353 = vcmp.eq.s32.totalorder %v360, %v1229
      %vm1354 = vcmp.eq.s32.totalorder %v361, %v1217
      %vm1355 = vcmp.eq.s32.totalorder %v361, %v1221
      %vm1356 = vcmp.eq.s32.totalorder %v361, %v1225
      %vm1357 = vcmp.eq.s32.totalorder %v361, %v1229
      %v1359 = vlaneseq
      %v1360 = vshrl.u32 %v1359, 7
      %v1361 = vsub.s32 0, %v1360
      %v1362 = vrot.slane %v1213, %v1361
      %v1363 = vlaneseq
      %v1364 = vshrl.u32 %v1363, 7
      %v1365 = vsub.s32 1, %v1364
      %v1366 = vrot.slane %v1213, %v1365
      %v1367 = vlaneseq
      %v1368 = vshrl.u32 %v1367, 7
      %v1369 = vsub.s32 2, %v1368
      %v1370 = vrot.slane %v1213, %v1369
      %v1371 = vlaneseq
      %v1372 = vshrl.u32 %v1371, 7
      %v1373 = vsub.s32 3, %v1372
      %v1374 = vrot.slane %v1213, %v1373
      %v1379 = vsel %vm1230, %v1362, 0.0
      %v1380 = vsel %vm1231, %v1366, 0.0
      %v1381 = vsel %vm1232, %v1370, 0.0
      %v1382 = vsel %vm1233, %v1374, 0.0
      %v1383 = vsel %vm1234, %v1362, 0.0
      %v1384 = vsel %vm1235, %v1366, 0.0
      %v1385 = vsel %vm1236, %v1370, 0.0
      %v1386 = vsel %vm1237, %v1374, 0.0
      %v1387 = vsel %vm1238, %v1362, 0.0
      %v1388 = vsel %vm1239, %v1366, 0.0
      %v1389 = vsel %vm1240, %v1370, 0.0
      %v1390 = vsel %vm1241, %v1374, 0.0
      %v1391 = vsel %vm1242, %v1362, 0.0
      %v1392 = vsel %vm1243, %v1366, 0.0
      %v1393 = vsel %vm1244, %v1370, 0.0
      %v1394 = vsel %vm1245, %v1374, 0.0
      %v1395 = vsel %vm1246, %v1362, 0.0
      %v1396 = vsel %vm1247, %v1366, 0.0
      %v1397 = vsel %vm1248, %v1370, 0.0
      %v1398 = vsel %vm1249, %v1374, 0.0
      %v1399 = vsel %vm1250, %v1362, 0.0
      %v1400 = vsel %vm1251, %v1366, 0.0
      %v1401 = vsel %vm1252, %v1370, 0.0
      %v1402 = vsel %vm1253, %v1374, 0.0
      %v1403 = vsel %vm1254, %v1362, 0.0
      %v1404 = vsel %vm1255, %v1366, 0.0
      %v1405 = vsel %vm1256, %v1370, 0.0
      %v1406 = vsel %vm1257, %v1374, 0.0
      %v1407 = vsel %vm1258, %v1362, 0.0
      %v1408 = vsel %vm1259, %v1366, 0.0
      %v1409 = vsel %vm1260, %v1370, 0.0
      %v1410 = vsel %vm1261, %v1374, 0.0
      %v1411 = vsel %vm1262, %v1362, 0.0
      %v1412 = vsel %vm1263, %v1366, 0.0
      %v1413 = vsel %vm1264, %v1370, 0.0
      %v1414 = vsel %vm1265, %v1374, 0.0
      %v1415 = vsel %vm1266, %v1362, 0.0
      %v1416 = vsel %vm1267, %v1366, 0.0
      %v1417 = vsel %vm1268, %v1370, 0.0
      %v1418 = vsel %vm1269, %v1374, 0.0
      %v1419 = vsel %vm1270, %v1362, 0.0
      %v1420 = vsel %vm1271, %v1366, 0.0
      %v1421 = vsel %vm1272, %v1370, 0.0
      %v1422 = vsel %vm1273, %v1374, 0.0
      %v1423 = vsel %vm1274, %v1362, 0.0
      %v1424 = vsel %vm1275, %v1366, 0.0
      %v1425 = vsel %vm1276, %v1370, 0.0
      %v1426 = vsel %vm1277, %v1374, 0.0
      %v1427 = vsel %vm1278, %v1362, 0.0
      %v1428 = vsel %vm1279, %v1366, 0.0
      %v1429 = vsel %vm1280, %v1370, 0.0
      %v1430 = vsel %vm1281, %v1374, 0.0
      %v1431 = vsel %vm1282, %v1362, 0.0
      %v1432 = vsel %vm1283, %v1366, 0.0
      %v1433 = vsel %vm1284, %v1370, 0.0
      %v1434 = vsel %vm1285, %v1374, 0.0
      %v1435 = vsel %vm1286, %v1362, 0.0
      %v1436 = vsel %vm1287, %v1366, 0.0
      %v1437 = vsel %vm1288, %v1370, 0.0
      %v1438 = vsel %vm1289, %v1374, 0.0
      %v1439 = vsel %vm1290, %v1362, 0.0
      %v1440 = vsel %vm1291, %v1366, 0.0
      %v1441 = vsel %vm1292, %v1370, 0.0
      %v1442 = vsel %vm1293, %v1374, 0.0
      %v1443 = vsel %vm1294, %v1362, 0.0
      %v1444 = vsel %vm1295, %v1366, 0.0
      %v1445 = vsel %vm1296, %v1370, 0.0
      %v1446 = vsel %vm1297, %v1374, 0.0
      %v1447 = vsel %vm1298, %v1362, 0.0
      %v1448 = vsel %vm1299, %v1366, 0.0
      %v1449 = vsel %vm1300, %v1370, 0.0
      %v1450 = vsel %vm1301, %v1374, 0.0
      %v1451 = vsel %vm1302, %v1362, 0.0
      %v1452 = vsel %vm1303, %v1366, 0.0
      %v1453 = vsel %vm1304, %v1370, 0.0
      %v1454 = vsel %vm1305, %v1374, 0.0
      %v1455 = vsel %vm1306, %v1362, 0.0
      %v1456 = vsel %vm1307, %v1366, 0.0
      %v1457 = vsel %vm1308, %v1370, 0.0
      %v1458 = vsel %vm1309, %v1374, 0.0
      %v1459 = vsel %vm1310, %v1362, 0.0
      %v1460 = vsel %vm1311, %v1366, 0.0
      %v1461 = vsel %vm1312, %v1370, 0.0
      %v1462 = vsel %vm1313, %v1374, 0.0
      %v1463 = vsel %vm1314, %v1362, 0.0
      %v1464 = vsel %vm1315, %v1366, 0.0
      %v1465 = vsel %vm1316, %v1370, 0.0
      %v1466 = vsel %vm1317, %v1374, 0.0
      %v1467 = vsel %vm1318, %v1362, 0.0
      %v1468 = vsel %vm1319, %v1366, 0.0
      %v1469 = vsel %vm1320, %v1370, 0.0
      %v1470 = vsel %vm1321, %v1374, 0.0
      %v1471 = vsel %vm1322, %v1362, 0.0
      %v1472 = vsel %vm1323, %v1366, 0.0
      %v1473 = vsel %vm1324, %v1370, 0.0
      %v1474 = vsel %vm1325, %v1374, 0.0
      %v1475 = vsel %vm1326, %v1362, 0.0
      %v1476 = vsel %vm1327, %v1366, 0.0
      %v1477 = vsel %vm1328, %v1370, 0.0
      %v1478 = vsel %vm1329, %v1374, 0.0
      %v1479 = vsel %vm1330, %v1362, 0.0
      %v1480 = vsel %vm1331, %v1366, 0.0
      %v1481 = vsel %vm1332, %v1370, 0.0
      %v1482 = vsel %vm1333, %v1374, 0.0
      %v1483 = vsel %vm1334, %v1362, 0.0
      %v1484 = vsel %vm1335, %v1366, 0.0
      %v1485 = vsel %vm1336, %v1370, 0.0
      %v1486 = vsel %vm1337, %v1374, 0.0
      %v1487 = vsel %vm1338, %v1362, 0.0
      %v1488 = vsel %vm1339, %v1366, 0.0
      %v1489 = vsel %vm1340, %v1370, 0.0
      %v1490 = vsel %vm1341, %v1374, 0.0
      %v1491 = vsel %vm1342, %v1362, 0.0
      %v1492 = vsel %vm1343, %v1366, 0.0
      %v1493 = vsel %vm1344, %v1370, 0.0
      %v1494 = vsel %vm1345, %v1374, 0.0
      %v1495 = vsel %vm1346, %v1362, 0.0
      %v1496 = vsel %vm1347, %v1366, 0.0
      %v1497 = vsel %vm1348, %v1370, 0.0
      %v1498 = vsel %vm1349, %v1374, 0.0
      %v1499 = vsel %vm1350, %v1362, 0.0
      %v1500 = vsel %vm1351, %v1366, 0.0
      %v1501 = vsel %vm1352, %v1370, 0.0
      %v1502 = vsel %vm1353, %v1374, 0.0
      %v1503 = vsel %vm1354, %v1362, 0.0
      %v1504 = vsel %vm1355, %v1366, 0.0
      %v1505 = vsel %vm1356, %v1370, 0.0
      %v1506 = vsel %vm1357, %v1374, 0.0
      %v1507 = vadd.f32 %v1082, %v1379
      %v1508 = vadd.f32 %v1083, %v1380
      %v1509 = vadd.f32 %v1084, %v1381
      %v1510 = vadd.f32 %v1085, %v1382
      %v1511 = vadd.f32 %v1086, %v1383
      %v1512 = vadd.f32 %v1087, %v1384
      %v1513 = vadd.f32 %v1088, %v1385
      %v1514 = vadd.f32 %v1089, %v1386
      %v1515 = vadd.f32 %v1090, %v1387
      %v1516 = vadd.f32 %v1091, %v1388
      %v1517 = vadd.f32 %v1092, %v1389
      %v1518 = vadd.f32 %v1093, %v1390
      %v1519 = vadd.f32 %v1094, %v1391
      %v1520 = vadd.f32 %v1095, %v1392
      %v1521 = vadd.f32 %v1096, %v1393
      %v1522 = vadd.f32 %v1097, %v1394
      %v1523 = vadd.f32 %v1098, %v1395
      %v1524 = vadd.f32 %v1099, %v1396
      %v1525 = vadd.f32 %v1100, %v1397
      %v1526 = vadd.f32 %v1101, %v1398
      %v1527 = vadd.f32 %v1102, %v1399
      %v1528 = vadd.f32 %v1103, %v1400
      %v1529 = vadd.f32 %v1104, %v1401
      %v1530 = vadd.f32 %v1105, %v1402
      %v1531 = vadd.f32 %v1106, %v1403
      %v1532 = vadd.f32 %v1107, %v1404
      %v1533 = vadd.f32 %v1108, %v1405
      %v1534 = vadd.f32 %v1109, %v1406
      %v1535 = vadd.f32 %v1110, %v1407
      %v1536 = vadd.f32 %v1111, %v1408
      %v1537 = vadd.f32 %v1112, %v1409
      %v1538 = vadd.f32 %v1113, %v1410
      %v1539 = vadd.f32 %v1114, %v1411
      %v1540 = vadd.f32 %v1115, %v1412
      %v1541 = vadd.f32 %v1116, %v1413
      %v1542 = vadd.f32 %v1117, %v1414
      %v1543 = vadd.f32 %v1118, %v1415
      %v1544 = vadd.f32 %v1119, %v1416
      %v1545 = vadd.f32 %v1120, %v1417
      %v1546 = vadd.f32 %v1121, %v1418
      %v1547 = vadd.f32 %v1122, %v1419
      %v1548 = vadd.f32 %v1123, %v1420
      %v1549 = vadd.f32 %v1124, %v1421
      %v1550 = vadd.f32 %v1125, %v1422
      %v1551 = vadd.f32 %v1126, %v1423
      %v1552 = vadd.f32 %v1127, %v1424
      %v1553 = vadd.f32 %v1128, %v1425
      %v1554 = vadd.f32 %v1129, %v1426
      %v1555 = vadd.f32 %v1130, %v1427
      %v1556 = vadd.f32 %v1131, %v1428
      %v1557 = vadd.f32 %v1132, %v1429
      %v1558 = vadd.f32 %v1133, %v1430
      %v1559 = vadd.f32 %v1134, %v1431
      %v1560 = vadd.f32 %v1135, %v1432
      %v1561 = vadd.f32 %v1136, %v1433
      %v1562 = vadd.f32 %v1137, %v1434
      %v1563 = vadd.f32 %v1138, %v1435
      %v1564 = vadd.f32 %v1139, %v1436
      %v1565 = vadd.f32 %v1140, %v1437
      %v1566 = vadd.f32 %v1141, %v1438
      %v1567 = vadd.f32 %v1142, %v1439
      %v1568 = vadd.f32 %v1143, %v1440
      %v1569 = vadd.f32 %v1144, %v1441
      %v1570 = vadd.f32 %v1145, %v1442
      %v1571 = vadd.f32 %v1146, %v1443
      %v1572 = vadd.f32 %v1147, %v1444
      %v1573 = vadd.f32 %v1148, %v1445
      %v1574 = vadd.f32 %v1149, %v1446
      %v1575 = vadd.f32 %v1150, %v1447
      %v1576 = vadd.f32 %v1151, %v1448
      %v1577 = vadd.f32 %v1152, %v1449
      %v1578 = vadd.f32 %v1153, %v1450
      %v1579 = vadd.f32 %v1154, %v1451
      %v1580 = vadd.f32 %v1155, %v1452
      %v1581 = vadd.f32 %v1156, %v1453
      %v1582 = vadd.f32 %v1157, %v1454
      %v1583 = vadd.f32 %v1158, %v1455
      %v1584 = vadd.f32 %v1159, %v1456
      %v1585 = vadd.f32 %v1160, %v1457
      %v1586 = vadd.f32 %v1161, %v1458
      %v1587 = vadd.f32 %v1162, %v1459
      %v1588 = vadd.f32 %v1163, %v1460
      %v1589 = vadd.f32 %v1164, %v1461
      %v1590 = vadd.f32 %v1165, %v1462
      %v1591 = vadd.f32 %v1166, %v1463
      %v1592 = vadd.f32 %v1167, %v1464
      %v1593 = vadd.f32 %v1168, %v1465
      %v1594 = vadd.f32 %v1169, %v1466
      %v1595 = vadd.f32 %v1170, %v1467
      %v1596 = vadd.f32 %v1171, %v1468
      %v1597 = vadd.f32 %v1172, %v1469
      %v1598 = vadd.f32 %v1173, %v1470
      %v1599 = vadd.f32 %v1174, %v1471
      %v1600 = vadd.f32 %v1175, %v1472
      %v1601 = vadd.f32 %v1176, %v1473
      %v1602 = vadd.f32 %v1177, %v1474
      %v1603 = vadd.f32 %v1178, %v1475
      %v1604 = vadd.f32 %v1179, %v1476
      %v1605 = vadd.f32 %v1180, %v1477
      %v1606 = vadd.f32 %v1181, %v1478
      %v1607 = vadd.f32 %v1182, %v1479
      %v1608 = vadd.f32 %v1183, %v1480
      %v1609 = vadd.f32 %v1184, %v1481
      %v1610 = vadd.f32 %v1185, %v1482
      %v1611 = vadd.f32 %v1186, %v1483
      %v1612 = vadd.f32 %v1187, %v1484
      %v1613 = vadd.f32 %v1188, %v1485
      %v1614 = vadd.f32 %v1189, %v1486
      %v1615 = vadd.f32 %v1190, %v1487
      %v1616 = vadd.f32 %v1191, %v1488
      %v1617 = vadd.f32 %v1192, %v1489
      %v1618 = vadd.f32 %v1193, %v1490
      %v1619 = vadd.f32 %v1194, %v1491
      %v1620 = vadd.f32 %v1195, %v1492
      %v1621 = vadd.f32 %v1196, %v1493
      %v1622 = vadd.f32 %v1197, %v1494
      %v1623 = vadd.f32 %v1198, %v1495
      %v1624 = vadd.f32 %v1199, %v1496
      %v1625 = vadd.f32 %v1200, %v1497
      %v1626 = vadd.f32 %v1201, %v1498
      %v1627 = vadd.f32 %v1202, %v1499
      %v1628 = vadd.f32 %v1203, %v1500
      %v1629 = vadd.f32 %v1204, %v1501
      %v1630 = vadd.f32 %v1205, %v1502
      %v1631 = vadd.f32 %v1206, %v1503
      %v1632 = vadd.f32 %v1207, %v1504
      %v1633 = vadd.f32 %v1208, %v1505
      %v1634 = vadd.f32 %v1209, %v1506
      %s1635 = scalar_lea.vmem %s257, 3
      %v1636 = vld [vmem:[%s1635] ss:$4 sm:$0xf]
      %s1637 = scalar_lea.vmem %s267, 3
      %v1638 = vld [vmem:[%s1637] ss:$4 sm:$0xf]
      %v1639 = vlaneseq
      %v1640 = vshrl.u32 %v1639, 7
      %v1641 = vsub.s32 0, %v1640
      %v1642 = vrot.slane %v1636, %v1641
      %v1643 = vlaneseq
      %v1644 = vshrl.u32 %v1643, 7
      %v1645 = vsub.s32 1, %v1644
      %v1646 = vrot.slane %v1636, %v1645
      %v1647 = vlaneseq
      %v1648 = vshrl.u32 %v1647, 7
      %v1649 = vsub.s32 2, %v1648
      %v1650 = vrot.slane %v1636, %v1649
      %v1651 = vlaneseq
      %v1652 = vshrl.u32 %v1651, 7
      %v1653 = vsub.s32 3, %v1652
      %v1654 = vrot.slane %v1636, %v1653
      %vm1655 = vcmp.eq.s32.totalorder %v330, %v1642
      %vm1656 = vcmp.eq.s32.totalorder %v330, %v1646
      %vm1657 = vcmp.eq.s32.totalorder %v330, %v1650
      %vm1658 = vcmp.eq.s32.totalorder %v330, %v1654
      %vm1659 = vcmp.eq.s32.totalorder %v331, %v1642
      %vm1660 = vcmp.eq.s32.totalorder %v331, %v1646
      %vm1661 = vcmp.eq.s32.totalorder %v331, %v1650
      %vm1662 = vcmp.eq.s32.totalorder %v331, %v1654
      %vm1663 = vcmp.eq.s32.totalorder %v332, %v1642
      %vm1664 = vcmp.eq.s32.totalorder %v332, %v1646
      %vm1665 = vcmp.eq.s32.totalorder %v332, %v1650
      %vm1666 = vcmp.eq.s32.totalorder %v332, %v1654
      %vm1667 = vcmp.eq.s32.totalorder %v333, %v1642
      %vm1668 = vcmp.eq.s32.totalorder %v333, %v1646
      %vm1669 = vcmp.eq.s32.totalorder %v333, %v1650
      %vm1670 = vcmp.eq.s32.totalorder %v333, %v1654
      %vm1671 = vcmp.eq.s32.totalorder %v334, %v1642
      %vm1672 = vcmp.eq.s32.totalorder %v334, %v1646
      %vm1673 = vcmp.eq.s32.totalorder %v334, %v1650
      %vm1674 = vcmp.eq.s32.totalorder %v334, %v1654
      %vm1675 = vcmp.eq.s32.totalorder %v335, %v1642
      %vm1676 = vcmp.eq.s32.totalorder %v335, %v1646
      %vm1677 = vcmp.eq.s32.totalorder %v335, %v1650
      %vm1678 = vcmp.eq.s32.totalorder %v335, %v1654
      %vm1679 = vcmp.eq.s32.totalorder %v336, %v1642
      %vm1680 = vcmp.eq.s32.totalorder %v336, %v1646
      %vm1681 = vcmp.eq.s32.totalorder %v336, %v1650
      %vm1682 = vcmp.eq.s32.totalorder %v336, %v1654
      %vm1683 = vcmp.eq.s32.totalorder %v337, %v1642
      %vm1684 = vcmp.eq.s32.totalorder %v337, %v1646
      %vm1685 = vcmp.eq.s32.totalorder %v337, %v1650
      %vm1686 = vcmp.eq.s32.totalorder %v337, %v1654
      %vm1687 = vcmp.eq.s32.totalorder %v338, %v1642
      %vm1688 = vcmp.eq.s32.totalorder %v338, %v1646
      %vm1689 = vcmp.eq.s32.totalorder %v338, %v1650
      %vm1690 = vcmp.eq.s32.totalorder %v338, %v1654
      %vm1691 = vcmp.eq.s32.totalorder %v339, %v1642
      %vm1692 = vcmp.eq.s32.totalorder %v339, %v1646
      %vm1693 = vcmp.eq.s32.totalorder %v339, %v1650
      %vm1694 = vcmp.eq.s32.totalorder %v339, %v1654
      %vm1695 = vcmp.eq.s32.totalorder %v340, %v1642
      %vm1696 = vcmp.eq.s32.totalorder %v340, %v1646
      %vm1697 = vcmp.eq.s32.totalorder %v340, %v1650
      %vm1698 = vcmp.eq.s32.totalorder %v340, %v1654
      %vm1699 = vcmp.eq.s32.totalorder %v341, %v1642
      %vm1700 = vcmp.eq.s32.totalorder %v341, %v1646
      %vm1701 = vcmp.eq.s32.totalorder %v341, %v1650
      %vm1702 = vcmp.eq.s32.totalorder %v341, %v1654
      %vm1703 = vcmp.eq.s32.totalorder %v342, %v1642
      %vm1704 = vcmp.eq.s32.totalorder %v342, %v1646
      %vm1705 = vcmp.eq.s32.totalorder %v342, %v1650
      %vm1706 = vcmp.eq.s32.totalorder %v342, %v1654
      %vm1707 = vcmp.eq.s32.totalorder %v343, %v1642
      %vm1708 = vcmp.eq.s32.totalorder %v343, %v1646
      %vm1709 = vcmp.eq.s32.totalorder %v343, %v1650
      %vm1710 = vcmp.eq.s32.totalorder %v343, %v1654
      %vm1711 = vcmp.eq.s32.totalorder %v344, %v1642
      %vm1712 = vcmp.eq.s32.totalorder %v344, %v1646
      %vm1713 = vcmp.eq.s32.totalorder %v344, %v1650
      %vm1714 = vcmp.eq.s32.totalorder %v344, %v1654
      %vm1715 = vcmp.eq.s32.totalorder %v345, %v1642
      %vm1716 = vcmp.eq.s32.totalorder %v345, %v1646
      %vm1717 = vcmp.eq.s32.totalorder %v345, %v1650
      %vm1718 = vcmp.eq.s32.totalorder %v345, %v1654
      %vm1719 = vcmp.eq.s32.totalorder %v346, %v1642
      %vm1720 = vcmp.eq.s32.totalorder %v346, %v1646
      %vm1721 = vcmp.eq.s32.totalorder %v346, %v1650
      %vm1722 = vcmp.eq.s32.totalorder %v346, %v1654
      %vm1723 = vcmp.eq.s32.totalorder %v347, %v1642
      %vm1724 = vcmp.eq.s32.totalorder %v347, %v1646
      %vm1725 = vcmp.eq.s32.totalorder %v347, %v1650
      %vm1726 = vcmp.eq.s32.totalorder %v347, %v1654
      %vm1727 = vcmp.eq.s32.totalorder %v348, %v1642
      %vm1728 = vcmp.eq.s32.totalorder %v348, %v1646
      %vm1729 = vcmp.eq.s32.totalorder %v348, %v1650
      %vm1730 = vcmp.eq.s32.totalorder %v348, %v1654
      %vm1731 = vcmp.eq.s32.totalorder %v349, %v1642
      %vm1732 = vcmp.eq.s32.totalorder %v349, %v1646
      %vm1733 = vcmp.eq.s32.totalorder %v349, %v1650
      %vm1734 = vcmp.eq.s32.totalorder %v349, %v1654
      %vm1735 = vcmp.eq.s32.totalorder %v350, %v1642
      %vm1736 = vcmp.eq.s32.totalorder %v350, %v1646
      %vm1737 = vcmp.eq.s32.totalorder %v350, %v1650
      %vm1738 = vcmp.eq.s32.totalorder %v350, %v1654
      %vm1739 = vcmp.eq.s32.totalorder %v351, %v1642
      %vm1740 = vcmp.eq.s32.totalorder %v351, %v1646
      %vm1741 = vcmp.eq.s32.totalorder %v351, %v1650
      %vm1742 = vcmp.eq.s32.totalorder %v351, %v1654
      %vm1743 = vcmp.eq.s32.totalorder %v352, %v1642
      %vm1744 = vcmp.eq.s32.totalorder %v352, %v1646
      %vm1745 = vcmp.eq.s32.totalorder %v352, %v1650
      %vm1746 = vcmp.eq.s32.totalorder %v352, %v1654
      %vm1747 = vcmp.eq.s32.totalorder %v353, %v1642
      %vm1748 = vcmp.eq.s32.totalorder %v353, %v1646
      %vm1749 = vcmp.eq.s32.totalorder %v353, %v1650
      %vm1750 = vcmp.eq.s32.totalorder %v353, %v1654
      %vm1751 = vcmp.eq.s32.totalorder %v354, %v1642
      %vm1752 = vcmp.eq.s32.totalorder %v354, %v1646
      %vm1753 = vcmp.eq.s32.totalorder %v354, %v1650
      %vm1754 = vcmp.eq.s32.totalorder %v354, %v1654
      %vm1755 = vcmp.eq.s32.totalorder %v355, %v1642
      %vm1756 = vcmp.eq.s32.totalorder %v355, %v1646
      %vm1757 = vcmp.eq.s32.totalorder %v355, %v1650
      %vm1758 = vcmp.eq.s32.totalorder %v355, %v1654
      %vm1759 = vcmp.eq.s32.totalorder %v356, %v1642
      %vm1760 = vcmp.eq.s32.totalorder %v356, %v1646
      %vm1761 = vcmp.eq.s32.totalorder %v356, %v1650
      %vm1762 = vcmp.eq.s32.totalorder %v356, %v1654
      %vm1763 = vcmp.eq.s32.totalorder %v357, %v1642
      %vm1764 = vcmp.eq.s32.totalorder %v357, %v1646
      %vm1765 = vcmp.eq.s32.totalorder %v357, %v1650
      %vm1766 = vcmp.eq.s32.totalorder %v357, %v1654
      %vm1767 = vcmp.eq.s32.totalorder %v358, %v1642
      %vm1768 = vcmp.eq.s32.totalorder %v358, %v1646
      %vm1769 = vcmp.eq.s32.totalorder %v358, %v1650
      %vm1770 = vcmp.eq.s32.totalorder %v358, %v1654
      %vm1771 = vcmp.eq.s32.totalorder %v359, %v1642
      %vm1772 = vcmp.eq.s32.totalorder %v359, %v1646
      %vm1773 = vcmp.eq.s32.totalorder %v359, %v1650
      %vm1774 = vcmp.eq.s32.totalorder %v359, %v1654
      %vm1775 = vcmp.eq.s32.totalorder %v360, %v1642
      %vm1776 = vcmp.eq.s32.totalorder %v360, %v1646
      %vm1777 = vcmp.eq.s32.totalorder %v360, %v1650
      %vm1778 = vcmp.eq.s32.totalorder %v360, %v1654
      %vm1779 = vcmp.eq.s32.totalorder %v361, %v1642
      %vm1780 = vcmp.eq.s32.totalorder %v361, %v1646
      %vm1781 = vcmp.eq.s32.totalorder %v361, %v1650
      %vm1782 = vcmp.eq.s32.totalorder %v361, %v1654
      %v1784 = vlaneseq
      %v1785 = vshrl.u32 %v1784, 7
      %v1786 = vsub.s32 0, %v1785
      %v1787 = vrot.slane %v1638, %v1786
      %v1788 = vlaneseq
      %v1789 = vshrl.u32 %v1788, 7
      %v1790 = vsub.s32 1, %v1789
      %v1791 = vrot.slane %v1638, %v1790
      %v1792 = vlaneseq
      %v1793 = vshrl.u32 %v1792, 7
      %v1794 = vsub.s32 2, %v1793
      %v1795 = vrot.slane %v1638, %v1794
      %v1796 = vlaneseq
      %v1797 = vshrl.u32 %v1796, 7
      %v1798 = vsub.s32 3, %v1797
      %v1799 = vrot.slane %v1638, %v1798
      %v1804 = vsel %vm1655, %v1787, 0.0
      %v1805 = vsel %vm1656, %v1791, 0.0
      %v1806 = vsel %vm1657, %v1795, 0.0
      %v1807 = vsel %vm1658, %v1799, 0.0
      %v1808 = vsel %vm1659, %v1787, 0.0
      %v1809 = vsel %vm1660, %v1791, 0.0
      %v1810 = vsel %vm1661, %v1795, 0.0
      %v1811 = vsel %vm1662, %v1799, 0.0
      %v1812 = vsel %vm1663, %v1787, 0.0
      %v1813 = vsel %vm1664, %v1791, 0.0
      %v1814 = vsel %vm1665, %v1795, 0.0
      %v1815 = vsel %vm1666, %v1799, 0.0
      %v1816 = vsel %vm1667, %v1787, 0.0
      %v1817 = vsel %vm1668, %v1791, 0.0
      %v1818 = vsel %vm1669, %v1795, 0.0
      %v1819 = vsel %vm1670, %v1799, 0.0
      %v1820 = vsel %vm1671, %v1787, 0.0
      %v1821 = vsel %vm1672, %v1791, 0.0
      %v1822 = vsel %vm1673, %v1795, 0.0
      %v1823 = vsel %vm1674, %v1799, 0.0
      %v1824 = vsel %vm1675, %v1787, 0.0
      %v1825 = vsel %vm1676, %v1791, 0.0
      %v1826 = vsel %vm1677, %v1795, 0.0
      %v1827 = vsel %vm1678, %v1799, 0.0
      %v1828 = vsel %vm1679, %v1787, 0.0
      %v1829 = vsel %vm1680, %v1791, 0.0
      %v1830 = vsel %vm1681, %v1795, 0.0
      %v1831 = vsel %vm1682, %v1799, 0.0
      %v1832 = vsel %vm1683, %v1787, 0.0
      %v1833 = vsel %vm1684, %v1791, 0.0
      %v1834 = vsel %vm1685, %v1795, 0.0
      %v1835 = vsel %vm1686, %v1799, 0.0
      %v1836 = vsel %vm1687, %v1787, 0.0
      %v1837 = vsel %vm1688, %v1791, 0.0
      %v1838 = vsel %vm1689, %v1795, 0.0
      %v1839 = vsel %vm1690, %v1799, 0.0
      %v1840 = vsel %vm1691, %v1787, 0.0
      %v1841 = vsel %vm1692, %v1791, 0.0
      %v1842 = vsel %vm1693, %v1795, 0.0
      %v1843 = vsel %vm1694, %v1799, 0.0
      %v1844 = vsel %vm1695, %v1787, 0.0
      %v1845 = vsel %vm1696, %v1791, 0.0
      %v1846 = vsel %vm1697, %v1795, 0.0
      %v1847 = vsel %vm1698, %v1799, 0.0
      %v1848 = vsel %vm1699, %v1787, 0.0
      %v1849 = vsel %vm1700, %v1791, 0.0
      %v1850 = vsel %vm1701, %v1795, 0.0
      %v1851 = vsel %vm1702, %v1799, 0.0
      %v1852 = vsel %vm1703, %v1787, 0.0
      %v1853 = vsel %vm1704, %v1791, 0.0
      %v1854 = vsel %vm1705, %v1795, 0.0
      %v1855 = vsel %vm1706, %v1799, 0.0
      %v1856 = vsel %vm1707, %v1787, 0.0
      %v1857 = vsel %vm1708, %v1791, 0.0
      %v1858 = vsel %vm1709, %v1795, 0.0
      %v1859 = vsel %vm1710, %v1799, 0.0
      %v1860 = vsel %vm1711, %v1787, 0.0
      %v1861 = vsel %vm1712, %v1791, 0.0
      %v1862 = vsel %vm1713, %v1795, 0.0
      %v1863 = vsel %vm1714, %v1799, 0.0
      %v1864 = vsel %vm1715, %v1787, 0.0
      %v1865 = vsel %vm1716, %v1791, 0.0
      %v1866 = vsel %vm1717, %v1795, 0.0
      %v1867 = vsel %vm1718, %v1799, 0.0
      %v1868 = vsel %vm1719, %v1787, 0.0
      %v1869 = vsel %vm1720, %v1791, 0.0
      %v1870 = vsel %vm1721, %v1795, 0.0
      %v1871 = vsel %vm1722, %v1799, 0.0
      %v1872 = vsel %vm1723, %v1787, 0.0
      %v1873 = vsel %vm1724, %v1791, 0.0
      %v1874 = vsel %vm1725, %v1795, 0.0
      %v1875 = vsel %vm1726, %v1799, 0.0
      %v1876 = vsel %vm1727, %v1787, 0.0
      %v1877 = vsel %vm1728, %v1791, 0.0
      %v1878 = vsel %vm1729, %v1795, 0.0
      %v1879 = vsel %vm1730, %v1799, 0.0
      %v1880 = vsel %vm1731, %v1787, 0.0
      %v1881 = vsel %vm1732, %v1791, 0.0
      %v1882 = vsel %vm1733, %v1795, 0.0
      %v1883 = vsel %vm1734, %v1799, 0.0
      %v1884 = vsel %vm1735, %v1787, 0.0
      %v1885 = vsel %vm1736, %v1791, 0.0
      %v1886 = vsel %vm1737, %v1795, 0.0
      %v1887 = vsel %vm1738, %v1799, 0.0
      %v1888 = vsel %vm1739, %v1787, 0.0
      %v1889 = vsel %vm1740, %v1791, 0.0
      %v1890 = vsel %vm1741, %v1795, 0.0
      %v1891 = vsel %vm1742, %v1799, 0.0
      %v1892 = vsel %vm1743, %v1787, 0.0
      %v1893 = vsel %vm1744, %v1791, 0.0
      %v1894 = vsel %vm1745, %v1795, 0.0
      %v1895 = vsel %vm1746, %v1799, 0.0
      %v1896 = vsel %vm1747, %v1787, 0.0
      %v1897 = vsel %vm1748, %v1791, 0.0
      %v1898 = vsel %vm1749, %v1795, 0.0
      %v1899 = vsel %vm1750, %v1799, 0.0
      %v1900 = vsel %vm1751, %v1787, 0.0
      %v1901 = vsel %vm1752, %v1791, 0.0
      %v1902 = vsel %vm1753, %v1795, 0.0
      %v1903 = vsel %vm1754, %v1799, 0.0
      %v1904 = vsel %vm1755, %v1787, 0.0
      %v1905 = vsel %vm1756, %v1791, 0.0
      %v1906 = vsel %vm1757, %v1795, 0.0
      %v1907 = vsel %vm1758, %v1799, 0.0
      %v1908 = vsel %vm1759, %v1787, 0.0
      %v1909 = vsel %vm1760, %v1791, 0.0
      %v1910 = vsel %vm1761, %v1795, 0.0
      %v1911 = vsel %vm1762, %v1799, 0.0
      %v1912 = vsel %vm1763, %v1787, 0.0
      %v1913 = vsel %vm1764, %v1791, 0.0
      %v1914 = vsel %vm1765, %v1795, 0.0
      %v1915 = vsel %vm1766, %v1799, 0.0
      %v1916 = vsel %vm1767, %v1787, 0.0
      %v1917 = vsel %vm1768, %v1791, 0.0
      %v1918 = vsel %vm1769, %v1795, 0.0
      %v1919 = vsel %vm1770, %v1799, 0.0
      %v1920 = vsel %vm1771, %v1787, 0.0
      %v1921 = vsel %vm1772, %v1791, 0.0
      %v1922 = vsel %vm1773, %v1795, 0.0
      %v1923 = vsel %vm1774, %v1799, 0.0
      %v1924 = vsel %vm1775, %v1787, 0.0
      %v1925 = vsel %vm1776, %v1791, 0.0
      %v1926 = vsel %vm1777, %v1795, 0.0
      %v1927 = vsel %vm1778, %v1799, 0.0
      %v1928 = vsel %vm1779, %v1787, 0.0
      %v1929 = vsel %vm1780, %v1791, 0.0
      %v1930 = vsel %vm1781, %v1795, 0.0
      %v1931 = vsel %vm1782, %v1799, 0.0
      %v1932 = vadd.f32 %v1507, %v1804
      %v1933 = vadd.f32 %v1508, %v1805
      %v1934 = vadd.f32 %v1509, %v1806
      %v1935 = vadd.f32 %v1510, %v1807
      %v1936 = vadd.f32 %v1511, %v1808
      %v1937 = vadd.f32 %v1512, %v1809
      %v1938 = vadd.f32 %v1513, %v1810
      %v1939 = vadd.f32 %v1514, %v1811
      %v1940 = vadd.f32 %v1515, %v1812
      %v1941 = vadd.f32 %v1516, %v1813
      %v1942 = vadd.f32 %v1517, %v1814
      %v1943 = vadd.f32 %v1518, %v1815
      %v1944 = vadd.f32 %v1519, %v1816
      %v1945 = vadd.f32 %v1520, %v1817
      %v1946 = vadd.f32 %v1521, %v1818
      %v1947 = vadd.f32 %v1522, %v1819
      %v1948 = vadd.f32 %v1523, %v1820
      %v1949 = vadd.f32 %v1524, %v1821
      %v1950 = vadd.f32 %v1525, %v1822
      %v1951 = vadd.f32 %v1526, %v1823
      %v1952 = vadd.f32 %v1527, %v1824
      %v1953 = vadd.f32 %v1528, %v1825
      %v1954 = vadd.f32 %v1529, %v1826
      %v1955 = vadd.f32 %v1530, %v1827
      %v1956 = vadd.f32 %v1531, %v1828
      %v1957 = vadd.f32 %v1532, %v1829
      %v1958 = vadd.f32 %v1533, %v1830
      %v1959 = vadd.f32 %v1534, %v1831
      %v1960 = vadd.f32 %v1535, %v1832
      %v1961 = vadd.f32 %v1536, %v1833
      %v1962 = vadd.f32 %v1537, %v1834
      %v1963 = vadd.f32 %v1538, %v1835
      %v1964 = vadd.f32 %v1539, %v1836
      %v1965 = vadd.f32 %v1540, %v1837
      %v1966 = vadd.f32 %v1541, %v1838
      %v1967 = vadd.f32 %v1542, %v1839
      %v1968 = vadd.f32 %v1543, %v1840
      %v1969 = vadd.f32 %v1544, %v1841
      %v1970 = vadd.f32 %v1545, %v1842
      %v1971 = vadd.f32 %v1546, %v1843
      %v1972 = vadd.f32 %v1547, %v1844
      %v1973 = vadd.f32 %v1548, %v1845
      %v1974 = vadd.f32 %v1549, %v1846
      %v1975 = vadd.f32 %v1550, %v1847
      %v1976 = vadd.f32 %v1551, %v1848
      %v1977 = vadd.f32 %v1552, %v1849
      %v1978 = vadd.f32 %v1553, %v1850
      %v1979 = vadd.f32 %v1554, %v1851
      %v1980 = vadd.f32 %v1555, %v1852
      %v1981 = vadd.f32 %v1556, %v1853
      %v1982 = vadd.f32 %v1557, %v1854
      %v1983 = vadd.f32 %v1558, %v1855
      %v1984 = vadd.f32 %v1559, %v1856
      %v1985 = vadd.f32 %v1560, %v1857
      %v1986 = vadd.f32 %v1561, %v1858
      %v1987 = vadd.f32 %v1562, %v1859
      %v1988 = vadd.f32 %v1563, %v1860
      %v1989 = vadd.f32 %v1564, %v1861
      %v1990 = vadd.f32 %v1565, %v1862
      %v1991 = vadd.f32 %v1566, %v1863
      %v1992 = vadd.f32 %v1567, %v1864
      %v1993 = vadd.f32 %v1568, %v1865
      %v1994 = vadd.f32 %v1569, %v1866
      %v1995 = vadd.f32 %v1570, %v1867
      %v1996 = vadd.f32 %v1571, %v1868
      %v1997 = vadd.f32 %v1572, %v1869
      %v1998 = vadd.f32 %v1573, %v1870
      %v1999 = vadd.f32 %v1574, %v1871
      %v2000 = vadd.f32 %v1575, %v1872
      %v2001 = vadd.f32 %v1576, %v1873
      %v2002 = vadd.f32 %v1577, %v1874
      %v2003 = vadd.f32 %v1578, %v1875
      %v2004 = vadd.f32 %v1579, %v1876
      %v2005 = vadd.f32 %v1580, %v1877
      %v2006 = vadd.f32 %v1581, %v1878
      %v2007 = vadd.f32 %v1582, %v1879
      %v2008 = vadd.f32 %v1583, %v1880
      %v2009 = vadd.f32 %v1584, %v1881
      %v2010 = vadd.f32 %v1585, %v1882
      %v2011 = vadd.f32 %v1586, %v1883
      %v2012 = vadd.f32 %v1587, %v1884
      %v2013 = vadd.f32 %v1588, %v1885
      %v2014 = vadd.f32 %v1589, %v1886
      %v2015 = vadd.f32 %v1590, %v1887
      %v2016 = vadd.f32 %v1591, %v1888
      %v2017 = vadd.f32 %v1592, %v1889
      %v2018 = vadd.f32 %v1593, %v1890
      %v2019 = vadd.f32 %v1594, %v1891
      %v2020 = vadd.f32 %v1595, %v1892
      %v2021 = vadd.f32 %v1596, %v1893
      %v2022 = vadd.f32 %v1597, %v1894
      %v2023 = vadd.f32 %v1598, %v1895
      %v2024 = vadd.f32 %v1599, %v1896
      %v2025 = vadd.f32 %v1600, %v1897
      %v2026 = vadd.f32 %v1601, %v1898
      %v2027 = vadd.f32 %v1602, %v1899
      %v2028 = vadd.f32 %v1603, %v1900
      %v2029 = vadd.f32 %v1604, %v1901
      %v2030 = vadd.f32 %v1605, %v1902
      %v2031 = vadd.f32 %v1606, %v1903
      %v2032 = vadd.f32 %v1607, %v1904
      %v2033 = vadd.f32 %v1608, %v1905
      %v2034 = vadd.f32 %v1609, %v1906
      %v2035 = vadd.f32 %v1610, %v1907
      %v2036 = vadd.f32 %v1611, %v1908
      %v2037 = vadd.f32 %v1612, %v1909
      %v2038 = vadd.f32 %v1613, %v1910
      %v2039 = vadd.f32 %v1614, %v1911
      %v2040 = vadd.f32 %v1615, %v1912
      %v2041 = vadd.f32 %v1616, %v1913
      %v2042 = vadd.f32 %v1617, %v1914
      %v2043 = vadd.f32 %v1618, %v1915
      %v2044 = vadd.f32 %v1619, %v1916
      %v2045 = vadd.f32 %v1620, %v1917
      %v2046 = vadd.f32 %v1621, %v1918
      %v2047 = vadd.f32 %v1622, %v1919
      %v2048 = vadd.f32 %v1623, %v1920
      %v2049 = vadd.f32 %v1624, %v1921
      %v2050 = vadd.f32 %v1625, %v1922
      %v2051 = vadd.f32 %v1626, %v1923
      %v2052 = vadd.f32 %v1627, %v1924
      %v2053 = vadd.f32 %v1628, %v1925
      %v2054 = vadd.f32 %v1629, %v1926
      %v2055 = vadd.f32 %v1630, %v1927
      %v2056 = vadd.f32 %v1631, %v1928
      %v2057 = vadd.f32 %v1632, %v1929
      %v2058 = vadd.f32 %v1633, %v1930
      %v2059 = vadd.f32 %v1634, %v1931
      %v2060 = vld [vmem:[#allocation2] sm:$0xff]
      %v2061 = vld [vmem:[#allocation2 + $0x8] sm:$0xff]
      %v2062 = vld [vmem:[%s277] sm:$0xf]
      %v2063 = vpack.c.bf16 %v1936, %v1932
      %v2064 = vpack.c.bf16 %v1937, %v1933
      %v2065 = vpack.c.bf16 %v1938, %v1934
      %v2066 = vpack.c.bf16 %v1939, %v1935
      %v2067 = vpack.c.bf16 %v1944, %v1940
      %v2068 = vpack.c.bf16 %v1945, %v1941
      %v2069 = vpack.c.bf16 %v1946, %v1942
      %v2070 = vpack.c.bf16 %v1947, %v1943
      %v2071 = vpack.c.bf16 %v1952, %v1948
      %v2072 = vpack.c.bf16 %v1953, %v1949
      %v2073 = vpack.c.bf16 %v1954, %v1950
      %v2074 = vpack.c.bf16 %v1955, %v1951
      %v2075 = vpack.c.bf16 %v1960, %v1956
      %v2076 = vpack.c.bf16 %v1961, %v1957
      %v2077 = vpack.c.bf16 %v1962, %v1958
      %v2078 = vpack.c.bf16 %v1963, %v1959
      %v2079 = vpack.c.bf16 %v1968, %v1964
      %v2080 = vpack.c.bf16 %v1969, %v1965
      %v2081 = vpack.c.bf16 %v1970, %v1966
      %v2082 = vpack.c.bf16 %v1971, %v1967
      %v2083 = vpack.c.bf16 %v1976, %v1972
      %v2084 = vpack.c.bf16 %v1977, %v1973
      %v2085 = vpack.c.bf16 %v1978, %v1974
      %v2086 = vpack.c.bf16 %v1979, %v1975
      %v2087 = vpack.c.bf16 %v1984, %v1980
      %v2088 = vpack.c.bf16 %v1985, %v1981
      %v2089 = vpack.c.bf16 %v1986, %v1982
      %v2090 = vpack.c.bf16 %v1987, %v1983
      %v2091 = vpack.c.bf16 %v1992, %v1988
      %v2092 = vpack.c.bf16 %v1993, %v1989
      %v2093 = vpack.c.bf16 %v1994, %v1990
      %v2094 = vpack.c.bf16 %v1995, %v1991
      %v2095 = vpack.c.bf16 %v2000, %v1996
      %v2096 = vpack.c.bf16 %v2001, %v1997
      %v2097 = vpack.c.bf16 %v2002, %v1998
      %v2098 = vpack.c.bf16 %v2003, %v1999
      %v2099 = vpack.c.bf16 %v2008, %v2004
      %v2100 = vpack.c.bf16 %v2009, %v2005
      %v2101 = vpack.c.bf16 %v2010, %v2006
      %v2102 = vpack.c.bf16 %v2011, %v2007
      %v2103 = vpack.c.bf16 %v2016, %v2012
      %v2104 = vpack.c.bf16 %v2017, %v2013
      %v2105 = vpack.c.bf16 %v2018, %v2014
      %v2106 = vpack.c.bf16 %v2019, %v2015
      %v2107 = vpack.c.bf16 %v2024, %v2020
      %v2108 = vpack.c.bf16 %v2025, %v2021
      %v2109 = vpack.c.bf16 %v2026, %v2022
      %v2110 = vpack.c.bf16 %v2027, %v2023
      %v2111 = vpack.c.bf16 %v2032, %v2028
      %v2112 = vpack.c.bf16 %v2033, %v2029
      %v2113 = vpack.c.bf16 %v2034, %v2030
      %v2114 = vpack.c.bf16 %v2035, %v2031
      %v2115 = vpack.c.bf16 %v2040, %v2036
      %v2116 = vpack.c.bf16 %v2041, %v2037
      %v2117 = vpack.c.bf16 %v2042, %v2038
      %v2118 = vpack.c.bf16 %v2043, %v2039
      %v2119 = vpack.c.bf16 %v2048, %v2044
      %v2120 = vpack.c.bf16 %v2049, %v2045
      %v2121 = vpack.c.bf16 %v2050, %v2046
      %v2122 = vpack.c.bf16 %v2051, %v2047
      %v2123 = vpack.c.bf16 %v2056, %v2052
      %v2124 = vpack.c.bf16 %v2057, %v2053
      %v2125 = vpack.c.bf16 %v2058, %v2054
      %v2126 = vpack.c.bf16 %v2059, %v2055
      %v2129 = vunpack.c.l.s4 1983009808
      %v2130 = vunpack.c.0.s8 %v2129
      %v2131 = vlaneseq
      %v2132 = vshrl.u32 %v2131, 7
      %v2133 = vsub.s32 %v2130, %v2132
      %v2134 = vrot.slane %v2062, %v2133
      %v2135 = vcombine.high %v2134, %v2134
      %2138 = vmatprep.subr.bf16.mxu0 %v2092
      %2139 = vmatpush1.bf16.msra.mxu0 %v2091
      %2140 = vmatprep.subr.bf16.mxu0 %v2088
      %2141 = vmatpush1.bf16.msra.mxu0 %v2087
      %2142 = vmatprep.subr.bf16.mxu0 %v2084
      %2143 = vmatpush1.bf16.msra.mxu0 %v2083
      %2144 = vmatprep.subr.bf16.mxu0 %v2080
      %2145 = vmatpush1.bf16.msra.mxu0 %v2079
      %2146 = vmatprep.subr.bf16.mxu0 %v2076
      %2147 = vmatpush1.bf16.msra.mxu0 %v2075
      %2148 = vmatprep.subr.bf16.mxu0 %v2072
      %2149 = vmatpush1.bf16.msra.mxu0 %v2071
      %2150 = vmatprep.subr.bf16.mxu0 %v2068
      %2151 = vmatpush1.bf16.msra.mxu0 %v2067
      %2152 = vmatprep.subr.bf16.mxu0 %v2064
      %2153 = vmatpush1.bf16.msra.mxu0 %v2063
      %2154 = vmatprep.subr.bf16.mxu0 %v2124
      %2155 = vmatpush2.bf16.msra.mxu0 %v2123
      %2156 = vmatprep.subr.bf16.mxu0 %v2120
      %2157 = vmatpush2.bf16.msra.mxu0 %v2119
      %2158 = vmatprep.subr.bf16.mxu0 %v2116
      %2159 = vmatpush2.bf16.msra.mxu0 %v2115
      %2160 = vmatprep.subr.bf16.mxu0 %v2112
      %2161 = vmatpush2.bf16.msra.mxu0 %v2111
      %2162 = vmatprep.subr.bf16.mxu0 %v2108
      %2163 = vmatpush2.bf16.msra.mxu0 %v2107
      %2164 = vmatprep.subr.bf16.mxu0 %v2104
      %2165 = vmatpush2.bf16.msra.mxu0 %v2103
      %2166 = vmatprep.subr.bf16.mxu0 %v2100
      %2167 = vmatpush2.bf16.msra.mxu0 %v2099
      %2168 = vmatprep.subr.bf16.mxu0 %v2096
      %2169 = vmatpush2.bf16.msra.mxu0 %v2095
      %2170 = vmatprep.mubr.bf16.mxu0 %v2135
      %2171 = vmatmul.mubr.bf16.gmra.mxu0 %v2134
      %v2172 = vpop.f32.mrf.mxu0
      %v2173 = vadd.f32 0.0, %v2172
      %v2174 = vpop.f32.mrf.mxu0
      %v2175 = vadd.f32 0.0, %v2174
      %v2176 = vpop.f32.mrf.mxu0
      %v2177 = vpop.f32.mrf.mxu0
      %2178 = vdwg.mxu0
      %2179 = vmatprep.subr.bf16.mxu0 %v2094
      %2180 = vmatpush1.bf16.msra.mxu0 %v2093
      %2181 = vmatprep.subr.bf16.mxu0 %v2090
      %2182 = vmatpush1.bf16.msra.mxu0 %v2089
      %2183 = vmatprep.subr.bf16.mxu0 %v2086
      %2184 = vmatpush1.bf16.msra.mxu0 %v2085
      %2185 = vmatprep.subr.bf16.mxu0 %v2082
      %2186 = vmatpush1.bf16.msra.mxu0 %v2081
      %2187 = vmatprep.subr.bf16.mxu0 %v2078
      %2188 = vmatpush1.bf16.msra.mxu0 %v2077
      %2189 = vmatprep.subr.bf16.mxu0 %v2074
      %2190 = vmatpush1.bf16.msra.mxu0 %v2073
      %2191 = vmatprep.subr.bf16.mxu0 %v2070
      %2192 = vmatpush1.bf16.msra.mxu0 %v2069
      %2193 = vmatprep.subr.bf16.mxu0 %v2066
      %2194 = vmatpush1.bf16.msra.mxu0 %v2065
      %2195 = vmatprep.subr.bf16.mxu0 %v2126
      %2196 = vmatpush2.bf16.msra.mxu0 %v2125
      %2197 = vmatprep.subr.bf16.mxu0 %v2122
      %2198 = vmatpush2.bf16.msra.mxu0 %v2121
      %2199 = vmatprep.subr.bf16.mxu0 %v2118
      %2200 = vmatpush2.bf16.msra.mxu0 %v2117
      %2201 = vmatprep.subr.bf16.mxu0 %v2114
      %2202 = vmatpush2.bf16.msra.mxu0 %v2113
      %2203 = vmatprep.subr.bf16.mxu0 %v2110
      %2204 = vmatpush2.bf16.msra.mxu0 %v2109
      %2205 = vmatprep.subr.bf16.mxu0 %v2106
      %2206 = vmatpush2.bf16.msra.mxu0 %v2105
      %2207 = vmatprep.subr.bf16.mxu0 %v2102
      %2208 = vmatpush2.bf16.msra.mxu0 %v2101
      %2209 = vmatprep.subr.bf16.mxu0 %v2098
      %2210 = vmatpush2.bf16.msra.mxu0 %v2097
      %2211 = vmatprep.mubr.bf16.mxu0 %v2135
      %2212 = vmatmul.mubr.bf16.gmra.mxu0 %v2134
      %v2213 = vpop.f32.mrf.mxu0
      %v2214 = vadd.f32 0.0, %v2213
      %v2215 = vpop.f32.mrf.mxu0
      %v2216 = vadd.f32 0.0, %v2215
      %v2217 = vpop.f32.mrf.mxu0
      %v2218 = vpop.f32.mrf.mxu0
      %2219 = vdwg.mxu0
      %v2224 = vcombine.low %v2173, %v2175
      %v2225 = vcombine.low %v2214, %v2216
      %v2228 = vadd.f32 %v2060, %v2224
      %v2229 = vadd.f32 %v2061, %v2225
      %2230 = vst [vmem:[#allocation2] sm:$0xff] %v2228
      %2231 = vst [vmem:[#allocation2 + $0x8] sm:$0xff] %v2229
      // Predicated region
      $region37: #{ddconv3d_forward.2} parent=31 // pred_check
        %p2232 = pneg %p289
      $region38: #{ddconv3d_forward.2} parent=31 // pred_check_branch
        %2234 = sbr.rel (%p2232) target = $region40
      $region39: #{ddconv3d_forward.2} parent=31 // pred_region
        %v2235 = vld [vmem:[#allocation2] sm:$0xff]
        %v2236 = vld [vmem:[#allocation2 + $0x8] sm:$0xff]
        %2237 = vst [vmem:[%s287] sm:$0xff] %v2235
        %2238 = vst [vmem:[%s287 + $0x8] sm:$0xff] %v2236
      $region40: #{ddconv3d_forward.2} parent=31 // pred_fallthru
        _
      %s2239 = smul.u32 4, %s20
      %p2240 = scmp.lt.s32.totalorder %s19, 1
      %s2241 = scalar_select %p2240, %s19, 1
      %p2242 = scmp.lt.s32.totalorder %s2239, 15
      %s2243 = scalar_select %p2242, %s2239, 15
      %s2244 = smul.addr %s2241, 16
      %s2245 = sadd.s32 %s2243, %s2244
      %s2246 = smul.addr %s2245, 4
      %s2247 = scalar_lea.vmem %s3, %s2246
      // Predicated region
      $region41: #{ddconv3d_forward.2} parent=31 // pred_check
        %p2248 = pneg %p137
      $region42: #{ddconv3d_forward.2} parent=31 // pred_check_branch
        %2250 = sbr.rel (%p2248) target = $region44
      $region43: #{ddconv3d_forward.2} parent=31 // pred_region
        %s2251 = smul.u32 4, %s20
      $region44: #{ddconv3d_forward.2} parent=31 // pred_fallthru
        _
    $region32: #{ddconv3d_forward.2} parent=5 // pred_fallthru
      _
    %p2252 = scmp.le.s32.totalorder 2, %s9
    // Predicated region
    $region45: #{ddconv3d_forward.2} parent=5 // pred_check
      %p2253 = pneg %p2252
    $region46: #{ddconv3d_forward.2} parent=5 // pred_check_branch
      %2255 = sbr.rel (%p2253) target = $region48
    $region47: #{ddconv3d_forward.2} parent=5 // pred_region
      %s2256 = ssub.s32 %s9, 2
      // Predicated region
      $region49: #{ddconv3d_forward.2} parent=47 // pred_check
        %p2257 = pneg %p143
      $region50: #{ddconv3d_forward.2} parent=47 // pred_check_branch
        %2259 = sbr.rel (%p2257) target = $region52
      $region51: #{ddconv3d_forward.2} parent=47 // pred_region
        %s2260 = smul.u32 4, %s23
        %p2261 = scmp.lt.s32.totalorder %s22, 1
        %s2262 = scalar_select %p2261, %s22, 1
        %p2263 = scmp.lt.s32.totalorder %s2260, 15
        %s2264 = scalar_select %p2263, %s2260, 15
        %s2265 = smul.addr %s2262, 16
        %s2266 = sadd.s32 %s2264, %s2265
        %s2267 = smul.addr %s2266, 4
        %s2268 = scalar_lea.vmem %s3, %s2267
      $region52: #{ddconv3d_forward.2} parent=47 // pred_fallthru
        _
    $region48: #{ddconv3d_forward.2} parent=5 // pred_fallthru
      _
  $region6: #{ddconv3d_forward.2} parent=0 // loop_footer
    %s13 = sadd.s32 1, %s9
  $region7: #{ddconv3d_forward.2} parent=0 // loop_footer_branch
    %8 = sbr.rel target = $region3
  $region8: #{ddconv3d_forward.2} parent=0 // loop_exit
    _

// kernel: ddconv3d_forward.3
$region0: #{ddconv3d_forward.3}
  #allocation0 [shape = 'u32[]', space=smem, size = 0x4, offset = 0x4, fixed_abs, tag = 'smem constant byte address 0x4 - core index']
  #allocation1 [shape = 'u32[144,128]{1,0:T(1,128)}', space=vmem, size = 0x12000, scoped, tag = 'internal scratch']
  %s0 = inlined_call_operand.vmem [shape: bf16[2,8,128], index: 0, kind: input, shape index: {}]
  %s1 = inlined_call_operand.vmem [shape: bf16[2,128,128], index: 1, kind: input, shape index: {}]
  %s2 = inlined_call_operand.vmem [shape: f32[1,8,1], index: 2, kind: input, shape index: {}]
  %s3 = inlined_call_operand.vmem [shape: f32[2,8,128], index: 3, kind: output, shape index: {}]
  %s4 = sld [smem:[#allocation0]]
  $region45: #{ddconv3d_forward.3} parent=0
    _
  %s6 = ssub.s32 1, %s4
  %s7 = scalar_select 0, %s6, %s4
  loop: start=0, step=1, limit=4
  $region2: #{ddconv3d_forward.3} parent=0 // loop_pre_header
    _
  $region3: #{ddconv3d_forward.3} parent=0 // loop_header
    %s9 = sphi 0, %s13
    %p10 = scmp.ge.s32.totalorder %s9, 4
    %s16 = sphi 0, %s28
    %s17 = sphi 0, %s24
    %s18 = sphi 0, %s16
    %s19 = sphi 0, %s17
    %s20 = sphi 0, %s18
    %s21 = sphi 0, %s19
    %s31 = sphi 0, %s33
    %s34 = sphi 0, %s31
    %s35 = sphi 0, %s34
    %s51 = sphi 0, %s35
    %s59 = sphi 0, %s61
    %s62 = sphi 0, %s59
    %s63 = sphi 0, %s62
    %s79 = sphi 0, %s63
    %s83 = sphi 0, %s83
    %s85 = sphi 0, %s83
    %s86 = sphi 0, %s85
    %s100 = sphi 0, %s86
    %s108 = sphi 0, %s110
    %s111 = sphi 0, %s108
    %s112 = sphi 0, %s111
    %s128 = sphi 0, %s112
  $region4: #{ddconv3d_forward.3} parent=0 // loop_header_branch
    %12 = sbr.rel (%p10) target = $region8
  $region5: #{ddconv3d_forward.3} parent=0 // loop_body
    %s14 = ssub.s32 %s9, 1
    %s15 = ssub.s32 %s9, 2
    %s22 = sadd.s32 1, %s17
    %p23 = scmp.ge.s32.totalorder %s22, 1
    %s24 = scalar_select %p23, 0, %s22
    %s25 = sadd.s32 1, %s16
    %s26 = scalar_select %p23, %s25, %s16
    %p27 = scmp.ge.s32.totalorder %s26, 2
    %s28 = scalar_select %p27, 0, %s26
    %s29 = ssub.s32 %s16, %s28
    %p30 = scmp.eq.s32.totalorder %s29, 0
    %s32 = sadd.s32 %s31, 1
    %s33 = scalar_select %p30, %s31, %s32
    %p36 = pneg %p30
    %p37 = scmp.eq.s32.totalorder %s9, 1
    %p38 = por %p36, %p37
    %p39 = scmp.ne.s32.totalorder %s31, %s34
    %p40 = scmp.eq.s32.totalorder %s9, 0
    %p41 = por %p39, %p40
    %p42 = scmp.ne.s32.totalorder %s31, %s34
    %p43 = scmp.eq.s32.totalorder %s14, 1
    %p44 = por %p42, %p43
    %p45 = scmp.ne.s32.totalorder %s34, %s35
    %p46 = scmp.eq.s32.totalorder %s14, 0
    %p47 = por %p45, %p46
    %p48 = scmp.ne.s32.totalorder %s34, %s35
    %p49 = scmp.eq.s32.totalorder %s15, 1
    %p50 = por %p48, %p49
    %p52 = scmp.ne.s32.totalorder %s35, %s51
    %p53 = scmp.eq.s32.totalorder %s15, 0
    %p54 = por %p52, %p53
    %s55 = ssub.s32 %s16, %s28
    %s56 = ssub.s32 %s17, %s24
    %s57 = sor.u32 %s55, %s56
    %p58 = scmp.eq.s32.totalorder %s57, 0
    %s60 = sadd.s32 %s59, 1
    %s61 = scalar_select %p58, %s59, %s60
    %p64 = pneg %p58
    %p65 = scmp.eq.s32.totalorder %s9, 1
    %p66 = por %p64, %p65
    %p67 = scmp.ne.s32.totalorder %s59, %s62
    %p68 = scmp.eq.s32.totalorder %s9, 0
    %p69 = por %p67, %p68
    %p70 = scmp.ne.s32.totalorder %s59, %s62
    %p71 = scmp.eq.s32.totalorder %s14, 1
    %p72 = por %p70, %p71
    %p73 = scmp.ne.s32.totalorder %s62, %s63
    %p74 = scmp.eq.s32.totalorder %s14, 0
    %p75 = por %p73, %p74
    %p76 = scmp.ne.s32.totalorder %s62, %s63
    %p77 = scmp.eq.s32.totalorder %s15, 1
    %p78 = por %p76, %p77
    %p80 = scmp.ne.s32.totalorder %s63, %s79
    %p81 = scmp.eq.s32.totalorder %s15, 0
    %p82 = por %p80, %p81
    %s84 = sadd.s32 %s83, 1
    %p87 = scmp.eq.s32.totalorder %s9, 1
    %p88 = scmp.ne.s32.totalorder %s83, %s85
    %p89 = scmp.eq.s32.totalorder %s9, 0
    %p90 = por %p88, %p89
    %p91 = scmp.ne.s32.totalorder %s83, %s85
    %p92 = scmp.eq.s32.totalorder %s14, 1
    %p93 = por %p91, %p92
    %p94 = scmp.ne.s32.totalorder %s85, %s86
    %p95 = scmp.eq.s32.totalorder %s14, 0
    %p96 = por %p94, %p95
    %p97 = scmp.ne.s32.totalorder %s85, %s86
    %p98 = scmp.eq.s32.totalorder %s15, 1
    %p99 = por %p97, %p98
    %p101 = scmp.ne.s32.totalorder %s86, %s100
    %p102 = scmp.eq.s32.totalorder %s15, 0
    %p103 = por %p101, %p102
    %s104 = ssub.s32 %s16, %s28
    %s105 = ssub.s32 %s17, %s24
    %s106 = sor.u32 %s104, %s105
    %p107 = scmp.eq.s32.totalorder %s106, 0
    %s109 = sadd.s32 %s108, 1
    %s110 = scalar_select %p107, %s108, %s109
    %p113 = pneg %p107
    %p114 = scmp.eq.s32.totalorder %s9, 1
    %p115 = por %p113, %p114
    %p116 = scmp.ne.s32.totalorder %s108, %s111
    %p117 = scmp.eq.s32.totalorder %s9, 0
    %p118 = por %p116, %p117
    %p119 = scmp.ne.s32.totalorder %s108, %s111
    %p120 = scmp.eq.s32.totalorder %s14, 1
    %p121 = por %p119, %p120
    %p122 = scmp.ne.s32.totalorder %s111, %s112
    %p123 = scmp.eq.s32.totalorder %s14, 0
    %p124 = por %p122, %p123
    %p125 = scmp.ne.s32.totalorder %s111, %s112
    %p126 = scmp.eq.s32.totalorder %s15, 1
    %p127 = por %p125, %p126
    %p129 = scmp.ne.s32.totalorder %s112, %s128
    %p130 = scmp.eq.s32.totalorder %s15, 0
    %p131 = por %p129, %p130
    %p132 = scmp.le.s32.totalorder 1, %s9
    %p133 = scmp.lt.s32.totalorder %s9, 3
    %p134 = pnand %p132, %p133
    %p135 = pneg %p134
    // Predicated region
    $region9: #{ddconv3d_forward.3} parent=5 // pred_check
      _
    $region10: #{ddconv3d_forward.3} parent=5 // pred_check_branch
      %137 = sbr.rel (%p134) target = $region12
    $region11: #{ddconv3d_forward.3} parent=5 // pred_region
      %s138 = ssub.s32 %s9, 1
      // Predicated region
      $region13: #{ddconv3d_forward.3} parent=11 // pred_check
        %p139 = pneg %p96
      $region14: #{ddconv3d_forward.3} parent=11 // pred_check_branch
        %141 = sbr.rel (%p139) target = $region16
      $region15: #{ddconv3d_forward.3} parent=11 // pred_region
        _
      $region16: #{ddconv3d_forward.3} parent=11 // pred_fallthru
        _
    $region12: #{ddconv3d_forward.3} parent=5 // pred_fallthru
      _
    %p142 = scmp.lt.s32.totalorder %s9, 2
    // Predicated region
    $region17: #{ddconv3d_forward.3} parent=5 // pred_check
      %p143 = pneg %p142
    $region18: #{ddconv3d_forward.3} parent=5 // pred_check_branch
      %145 = sbr.rel (%p143) target = $region20
    $region19: #{ddconv3d_forward.3} parent=5 // pred_region
      // Predicated region
      $region21: #{ddconv3d_forward.3} parent=19 // pred_check
        %p146 = pneg %p41
      $region22: #{ddconv3d_forward.3} parent=19 // pred_check_branch
        %148 = sbr.rel (%p146) target = $region24
      $region23: #{ddconv3d_forward.3} parent=19 // pred_region
        %p149 = scmp.lt.s32.totalorder %s16, 1
        %s150 = scalar_select %p149, %s16, 1
        %s151 = smul.addr %s150, 4
        %s152 = scalar_lea.vmem %s0, %s151
      $region24: #{ddconv3d_forward.3} parent=19 // pred_fallthru
        _
      // Predicated region
      $region25: #{ddconv3d_forward.3} parent=19 // pred_check
        %p153 = pneg %p69
      $region26: #{ddconv3d_forward.3} parent=19 // pred_check_branch
        %155 = sbr.rel (%p153) target = $region28
      $region27: #{ddconv3d_forward.3} parent=19 // pred_region
        %p156 = scmp.lt.s32.totalorder %s16, 1
        %s157 = scalar_select %p156, %s16, 1
        %p158 = scmp.lt.s32.totalorder %s17, 0
        %s159 = scalar_select %p158, %s17, 0
        %s160 = smul.addr %s157, 16
        %s161 = sadd.s32 %s159, %s160
        %s162 = smul.addr %s161, 4
        %s163 = scalar_lea.vmem %s1, %s162
      $region28: #{ddconv3d_forward.3} parent=19 // pred_fallthru
        _
    $region20: #{ddconv3d_forward.3} parent=5 // pred_fallthru
      _
    %p164 = scmp.le.s32.totalorder 1, %s9
    %p165 = scmp.lt.s32.totalorder %s9, 3
    %p166 = pnand %p164, %p165
    %p167 = pneg %p166
    // Predicated region
    $region29: #{ddconv3d_forward.3} parent=5 // pred_check
      _
    $region30: #{ddconv3d_forward.3} parent=5 // pred_check_branch
      %169 = sbr.rel (%p166) target = $region32
    $region31: #{ddconv3d_forward.3} parent=5 // pred_region
      %s170 = ssub.s32 %s9, 1
      %p171 = scmp.lt.s32.totalorder %s18, 1
      %s172 = scalar_select %p171, %s18, 1
      %s173 = smul.addr %s172, 4
      %s174 = scalar_lea.vmem %s0, %s173
      %p175 = pneg %p47
      %p176 = pneg %p44
      %p177 = scmp.lt.s32.totalorder %s18, 1
      %s178 = scalar_select %p177, %s18, 1
      %p179 = scmp.lt.s32.totalorder %s19, 0
      %s180 = scalar_select %p179, %s19, 0
      %s181 = smul.addr %s178, 16
      %s182 = sadd.s32 %s180, %s181
      %s183 = smul.addr %s182, 4
      %s184 = scalar_lea.vmem %s1, %s183
      %p185 = pneg %p75
      %p186 = pneg %p72
      %p187 = pneg %p96
      %p188 = pneg %p93
      %p189 = pneg %p124
      %p190 = pneg %p121
      %p191 = scmp.lt.s32.totalorder %s18, 1
      %s192 = scalar_select %p191, %s18, 1
      %p193 = scmp.lt.s32.totalorder %s19, 0
      %s194 = scalar_select %p193, %s19, 0
      %s195 = sadd.s32 %s194, %s192
      %s196 = smul.addr %s195, 8
      %s197 = scalar_lea.vmem %s3, %s196
      %p198 = scmp.lt.s32.totalorder %s18, 1
      %s199 = scalar_select %p198, %s18, 1
      %s200 = smul.addr %s199, 4
      %s201 = scalar_lea.vmem %s0, %s200
      %p202 = scmp.lt.s32.totalorder %s18, 1
      %s203 = scalar_select %p202, %s18, 1
      %p204 = scmp.lt.s32.totalorder %s19, 0
      %s205 = scalar_select %p204, %s19, 0
      %s206 = smul.addr %s203, 16
      %s207 = sadd.s32 %s205, %s206
      %s208 = smul.addr %s207, 4
      %s209 = scalar_lea.vmem %s1, %s208
      %p210 = scmp.lt.s32.totalorder %s18, 1
      %s211 = scalar_select %p210, %s18, 1
      %p212 = scmp.lt.s32.totalorder %s19, 0
      %s213 = scalar_select %p212, %s19, 0
      %s214 = sadd.s32 %s213, %s211
      %s215 = smul.addr %s214, 8
      %s216 = scalar_lea.vmem %s3, %s215
      %v218 = vld [vmem:[%s201] sm:$0xf]
      %v219 = vld [vmem:[%s209] sm:$0xf]
      %v220 = vld [vmem:[%s209 + $0x4] sm:$0xf]
      %v221 = vld [vmem:[%s209 + $0x8] sm:$0xf]
      %v222 = vld [vmem:[%s209 + $0xc] sm:$0xf]
      %v223 = vld [vmem:[%s209 + $0x10] sm:$0xf]
      %v224 = vld [vmem:[%s209 + $0x14] sm:$0xf]
      %v225 = vld [vmem:[%s209 + $0x18] sm:$0xf]
      %v226 = vld [vmem:[%s209 + $0x1c] sm:$0xf]
      %v227 = vld [vmem:[%s209 + $0x20] sm:$0xf]
      %v228 = vld [vmem:[%s209 + $0x24] sm:$0xf]
      %v229 = vld [vmem:[%s209 + $0x28] sm:$0xf]
      %v230 = vld [vmem:[%s209 + $0x2c] sm:$0xf]
      %v231 = vld [vmem:[%s209 + $0x30] sm:$0xf]
      %v232 = vld [vmem:[%s209 + $0x34] sm:$0xf]
      %v233 = vld [vmem:[%s209 + $0x38] sm:$0xf]
      %v234 = vld [vmem:[%s209 + $0x3c] sm:$0xf]
      %v235 = vld [vmem:[%s2] sm:$0xff]
      %237 = vset.pattern.permute.xlu0 0
      %238 = vperm.xlu0 %237, %v235
      %v239 = vpop.permute.xlu0 %238
      %v257 = vunpack.c.l.b16 %v219
      %v258 = vunpack.c.l.b16 %v220
      %v259 = vunpack.c.l.b16 %v221
      %v260 = vunpack.c.l.b16 %v222
      %v261 = vunpack.c.l.b16 %v223
      %v262 = vunpack.c.l.b16 %v224
      %v263 = vunpack.c.l.b16 %v225
      %v264 = vunpack.c.l.b16 %v226
      %v265 = vunpack.c.l.b16 %v227
      %v266 = vunpack.c.l.b16 %v228
      %v267 = vunpack.c.l.b16 %v229
      %v268 = vunpack.c.l.b16 %v230
      %v269 = vunpack.c.l.b16 %v231
      %v270 = vunpack.c.l.b16 %v232
      %v271 = vunpack.c.l.b16 %v233
      %v272 = vunpack.c.l.b16 %v234
      %v273 = vpack.c.b16 %v258, %v257
      %v274 = vpack.c.b16 %v260, %v259
      %v275 = vpack.c.b16 %v262, %v261
      %v276 = vpack.c.b16 %v264, %v263
      %v277 = vpack.c.b16 %v266, %v265
      %v278 = vpack.c.b16 %v268, %v267
      %v279 = vpack.c.b16 %v270, %v269
      %v280 = vpack.c.b16 %v272, %v271
      %289 = vmatprep.subr.bf16.mxu0 0
      %290 = vmatpush1.bf16.msra.mxu0 %v280
      %291 = vmatprep.subr.bf16.mxu0 0
      %292 = vmatpush1.bf16.msra.mxu0 %v279
      %293 = vmatprep.subr.bf16.mxu0 0
      %294 = vmatpush1.bf16.msra.mxu0 %v278
      %295 = vmatprep.subr.bf16.mxu0 0
      %296 = vmatpush1.bf16.msra.mxu0 %v277
      %297 = vmatprep.subr.bf16.mxu0 0
      %298 = vmatpush1.bf16.msra.mxu0 %v276
      %299 = vmatprep.subr.bf16.mxu0 0
      %300 = vmatpush1.bf16.msra.mxu0 %v275
      %301 = vmatprep.subr.bf16.mxu0 0
      %302 = vmatpush1.bf16.msra.mxu0 %v274
      %303 = vmatprep.subr.bf16.mxu0 0
      %304 = vmatpush1.bf16.msra.mxu0 %v273
      %305 = vmatprep.subr.bf16.mxu0 0
      %306 = vmatpush2.bf16.msra.mxu0 0
      %307 = vmatprep.subr.bf16.mxu0 0
      %308 = vmatpush2.bf16.msra.mxu0 0
      %309 = vmatprep.subr.bf16.mxu0 0
      %310 = vmatpush2.bf16.msra.mxu0 0
      %311 = vmatprep.subr.bf16.mxu0 0
      %312 = vmatpush2.bf16.msra.mxu0 0
      %313 = vmatprep.subr.bf16.mxu0 0
      %314 = vmatpush2.bf16.msra.mxu0 0
      %315 = vmatprep.subr.bf16.mxu0 0
      %316 = vmatpush2.bf16.msra.mxu0 0
      %317 = vmatprep.subr.bf16.mxu0 0
      %318 = vmatpush2.bf16.msra.mxu0 0
      %319 = vmatprep.subr.bf16.mxu0 0
      %320 = vmatpush2.bf16.msra.mxu0 0
      %321 = vmatprep.mubr.bf16.mxu0 0
      %322 = vmatmul.mubr.bf16.gmra.mxu0 %v218
      %v323 = vpop.f32.mrf.mxu0
      %v324 = vadd.f32 %v239, %v323
      %v325 = vpop.f32.mrf.mxu0
      %v326 = vpop.f32.mrf.mxu0
      %v327 = vpop.f32.mrf.mxu0
      %328 = vdwg.mxu0
      %329 = vst [vmem:[%s216] sm:$0xff] %v324
      %p330 = scmp.lt.s32.totalorder %s18, 1
      %s331 = scalar_select %p330, %s18, 1
      %p332 = scmp.lt.s32.totalorder %s19, 0
      %s333 = scalar_select %p332, %s19, 0
      %s334 = sadd.s32 %s333, %s331
      %s335 = smul.addr %s334, 8
      %s336 = scalar_lea.vmem %s3, %s335
      // Predicated region
      $region33: #{ddconv3d_forward.3} parent=31 // pred_check
        %p337 = pneg %p121
      $region34: #{ddconv3d_forward.3} parent=31 // pred_check_branch
        %339 = sbr.rel (%p337) target = $region36
      $region35: #{ddconv3d_forward.3} parent=31 // pred_region
        _
      $region36: #{ddconv3d_forward.3} parent=31 // pred_fallthru
        _
    $region32: #{ddconv3d_forward.3} parent=5 // pred_fallthru
      _
    %p340 = scmp.le.s32.totalorder 2, %s9
    // Predicated region
    $region37: #{ddconv3d_forward.3} parent=5 // pred_check
      %p341 = pneg %p340
    $region38: #{ddconv3d_forward.3} parent=5 // pred_check_branch
      %343 = sbr.rel (%p341) target = $region40
    $region39: #{ddconv3d_forward.3} parent=5 // pred_region
      %s344 = ssub.s32 %s9, 2
      // Predicated region
      $region41: #{ddconv3d_forward.3} parent=39 // pred_check
        %p345 = pneg %p127
      $region42: #{ddconv3d_forward.3} parent=39 // pred_check_branch
        %347 = sbr.rel (%p345) target = $region44
      $region43: #{ddconv3d_forward.3} parent=39 // pred_region
        %p348 = scmp.lt.s32.totalorder %s20, 1
        %s349 = scalar_select %p348, %s20, 1
        %p350 = scmp.lt.s32.totalorder %s21, 0
        %s351 = scalar_select %p350, %s21, 0
        %s352 = sadd.s32 %s351, %s349
        %s353 = smul.addr %s352, 8
        %s354 = scalar_lea.vmem %s3, %s353
      $region44: #{ddconv3d_forward.3} parent=39 // pred_fallthru
        _
    $region40: #{ddconv3d_forward.3} parent=5 // pred_fallthru
      _
  $region6: #{ddconv3d_forward.3} parent=0 // loop_footer
    %s13 = sadd.s32 1, %s9
  $region7: #{ddconv3d_forward.3} parent=0 // loop_footer_branch
    %8 = sbr.rel target = $region3
  $region8: #{ddconv3d_forward.3} parent=0 // loop_exit
    _

</llo_original>
